<compile_context>
chip_gen: v7x
topology: tpu7x:2x2x1
jax: 0.10.0
libtpu: 0.0.40
codegen_flags: <defaults>
</compile_context>

<pallas_src>
import functools
import math

import jax
import jax.numpy as jnp
from jax import lax
from jax.experimental import pallas as pl
from jax.experimental.pallas import tpu as pltpu


# ----------------------------- tiling config ---------------------------------

_TM = 512    # token-row tile for dense projections / FFN / logits
_TN = 512    # output-feature tile for dense projections / logits
_TF = 512    # ffn hidden tile (reduction axis of the fused FFN kernel)


def _vmem_limit_bytes():
    # Explicit VMEM budget so tiles stay valid on v7x (64 MiB physical) as well
    # as v5e/v6e (128 MiB).  Falls back to a conservative 32 MiB.
    try:
        cap = int(pltpu.get_tpu_info().vmem_capacity_bytes)
        return int(min(cap // 2, 64 * 1024 * 1024))
    except Exception:
        return 32 * 1024 * 1024


_VMEM_LIMIT = _vmem_limit_bytes()


def _pad_to_multiple(a, axis, mult):
    pad = (-a.shape[axis]) % mult
    if pad == 0:
        return a
    widths = [(0, 0)] * a.ndim
    widths[axis] = (0, pad)
    return jnp.pad(a, widths)


# ----------------------------- Pallas kernels --------------------------------

def _ln_mm_kernel(x_ref, g_ref, b_ref, w_ref, o_ref, hn_ref, *, eps):
    """out_tile = LayerNorm(x_tile) @ w_tile.

    LN is computed once per row tile (at n == 0) into a bf16 VMEM scratch and
    reused for every output-column tile (LN hoist)."""
    @pl.when(pl.program_id(1) == 0)
    def _():
        x = x_ref[...].astype(jnp.float32)
        mu = jnp.mean(x, axis=-1, keepdims=True)
        xc = x - mu
        var = jnp.mean(xc * xc, axis=-1, keepdims=True)
        hn = xc * lax.rsqrt(var + eps) * g_ref[...] + b_ref[...]
        hn_ref[...] = hn.astype(jnp.bfloat16)

    o_ref[...] = jnp.dot(hn_ref[...], w_ref[...],
                         preferred_element_type=jnp.float32).astype(o_ref.dtype)


def _ffn_kernel(x_ref, g_ref, b_ref, w1_ref, b1_ref, w2_ref, b2_ref,
                o_ref, acc_ref, hn_ref, *, eps):
    """out = x + fc2(gelu(fc1(LN(x)))) accumulated over the ffn axis.

    LN(x) is computed once (f == 0) into a bf16 scratch; the residual x is
    folded into the f32 accumulator at init so the store happens once."""
    f = pl.program_id(1)

    @pl.when(f == 0)
    def _():
        x = x_ref[...].astype(jnp.float32)
        mu = jnp.mean(x, axis=-1, keepdims=True)
        xc = x - mu
        var = jnp.mean(xc * xc, axis=-1, keepdims=True)
        hn = xc * lax.rsqrt(var + eps) * g_ref[...] + b_ref[...]
        hn_ref[...] = hn.astype(jnp.bfloat16)
        acc_ref[...] = x                       # residual, accumulated in f32

    h1 = jnp.dot(hn_ref[...], w1_ref[...],
                 preferred_element_type=jnp.float32) + b1_ref[...]
    h1 = jax.nn.gelu(h1, approximate=True)     # TODO(synk): exact erf GELU
    acc_ref[...] += jnp.dot(h1.astype(jnp.bfloat16), w2_ref[...],
                            preferred_element_type=jnp.float32)

    @pl.when(f == pl.num_programs(1) - 1)
    def _():
        o_ref[...] = (acc_ref[...] + b2_ref[...]).astype(o_ref.dtype)


def _retention_kernel(x_ref, q_ref, k_ref, v_ref, g_ref, wo_ref,
                      sin_ref, cos_ref, o_ref, acc_ref, *, eps):
    """One (batch, head) step of multi-scale retention.

    Per head: xpos-rotate q/k (merged into one dk-deep QK^T), apply the
    in-kernel decay mask (no HBM mask), abs-sum clamp with the analytic
    sqrt(row-sum) folded in, @V, per-head RMS group norm, swish gate,
    per-head slice of out_proj accumulated (with the residual) into a
    (S, D) f32 scratch; final head writes the bf16 output block."""
    h = pl.program_id(1)
    S, dk = q_ref.shape
    dk2 = dk // 2

    @pl.when(h == 0)
    def _():
        acc_ref[...] = x_ref[...].astype(jnp.float32)      # residual

    sin = sin_ref[...]
    cos = cos_ref[...]
    q = q_ref[...].astype(jnp.float32)
    k = k_ref[...].astype(jnp.float32)
    qe, qo = q[:, :dk2], q[:, dk2:]
    ke, ko = k[:, :dk2], k[:, dk2:]
    # xpos rotation (rotate-half form, weights pre-de-interleaved); one
    # dk-deep contraction instead of two dk/2-deep ones.
    q_rot = jnp.concatenate([qe * cos - qo * sin, qo * cos + qe * sin], axis=-1)
    k_rot = jnp.concatenate([ke * cos - ko * sin, ko * cos + ke * sin], axis=-1)
    qk = jnp.dot(q_rot.astype(jnp.bfloat16), k_rot.astype(jnp.bfloat16).T,
                 preferred_element_type=jnp.float32)                  # (S, S)

    # Per-head decay (log-space), computed from the head index: no mask input.
    hf = jnp.full((1, 1), pl.program_id(1), dtype=jnp.float32)
    d = jnp.log(1.0 - jnp.exp((-5.0 - hf) * math.log(2.0)))           # (1,1), < 0

    # Tril decay mask exp((i-j)*d) as an outer product of two length-S exp
    # vectors (centered so neither factor over/underflows at realistic S).
    c = 0.5 * (S - 1)
    ii = lax.broadcasted_iota(jnp.int32, (S, 1), 0).astype(jnp.float32)
    jj = lax.broadcasted_iota(jnp.int32, (1, S), 1).astype(jnp.float32)
    ai = jnp.exp((ii - c) * d)                                         # (S,1)
    bj = jnp.exp((c - jj) * d)                                         # (1,S)
    row = lax.broadcasted_iota(jnp.int32, (S, S), 0)
    col = lax.broadcasted_iota(jnp.int32, (S, S), 1)
    qk = qk * jnp.where(row >= col, ai * bj, 0.0)

    # sqrt(row-sum) of the decay mask via the geometric series
    #   rowsum_i = (1 - exp((i+1) d)) / (1 - exp(d)),
    # folded into the abs-sum clamp (== clamp(min=1) after normalization).
    e_d = jnp.exp(d)
    rowsum = (1.0 - jnp.exp((ii + 1.0) * d)) / (1.0 - e_d)             # (S,1)
    denom = jnp.maximum(jnp.sum(jnp.abs(qk), axis=-1, keepdims=True),
                        jnp.sqrt(rowsum))
    qk = qk * pl.reciprocal(denom, approx=True)

    oh = jnp.dot(qk.astype(jnp.bfloat16), v_ref[...],
                 preferred_element_type=jnp.float32)                   # (S, dv)
    # per-head group norm (RMS, no affine)
    oh = oh * lax.rsqrt(jnp.mean(oh * oh, axis=-1, keepdims=True) + eps)

    g = g_ref[...].astype(jnp.float32)
    gated = oh * (g / (1.0 + jnp.exp(-g)))                             # swish gate
    acc_ref[...] += jnp.dot(gated.astype(jnp.bfloat16), wo_ref[...],
                            preferred_element_type=jnp.float32)

    @pl.when(h == pl.num_programs(1) - 1)
    def _():
        o_ref[...] = acc_ref[...].astype(o_ref.dtype)


# ----------------------------- kernel wrappers --------------------------------

def ln_matmul(x, ln_g, ln_b, w, *, out_dtype, eps=1e-5):
    """LayerNorm(x) @ w, tiled over (M, N); LN computed once per row tile."""
    M, K = x.shape
    N = w.shape[1]
    tm = M if M <= _TM else _TM
    tn = N if N <= _TN else _TN
    xp = _pad_to_multiple(x, 0, tm)
    wp = _pad_to_multiple(w, 1, tn)
    Mp, Np = xp.shape[0], wp.shape[1]
    out = pl.pallas_call(
        functools.partial(_ln_mm_kernel, eps=eps),
        out_shape=jax.ShapeDtypeStruct((Mp, Np), out_dtype),
        grid=(Mp // tm, Np // tn),
        in_specs=[
            pl.BlockSpec((tm, K), lambda m, n: (m, 0)),
            pl.BlockSpec((1, K), lambda m, n: (0, 0)),
            pl.BlockSpec((1, K), lambda m, n: (0, 0)),
            pl.BlockSpec((K, tn), lambda m, n: (0, n)),
        ],
        out_specs=pl.BlockSpec((tm, tn), lambda m, n: (m, n)),
        scratch_shapes=[pltpu.VMEM((tm, K), jnp.bfloat16)],
        compiler_params=pltpu.CompilerParams(
            dimension_semantics=("parallel", "arbitrary"),
            vmem_limit_bytes=_VMEM_LIMIT),
    )(xp,
      ln_g.reshape(1, K).astype(jnp.float32),
      ln_b.reshape(1, K).astype(jnp.float32),
      wp)
    if (Mp, Np) != (M, N):
        out = out[:M, :N]
    return out


def ffn_block(x2d, ln_g, ln_b, w1, b1, w2, b2, *, eps=1e-5):
    """x + fc2(gelu(fc1(LN(x)))) with the ffn intermediate kept in VMEM."""
    M, D = x2d.shape
    F = w1.shape[1]
    tm = M if M <= _TM else _TM
    tf = F if F <= _TF else _TF
    xp = _pad_to_multiple(x2d, 0, tm)
    w1p = _pad_to_multiple(w1, 1, tf)
    b1p = _pad_to_multiple(b1.reshape(1, F).astype(jnp.float32), 1, tf)
    w2p = _pad_to_multiple(w2, 0, tf)
    Mp, Fp = xp.shape[0], w1p.shape[1]
    out = pl.pallas_call(
        functools.partial(_ffn_kernel, eps=eps),
        out_shape=jax.ShapeDtypeStruct((Mp, D), jnp.bfloat16),
        grid=(Mp // tm, Fp // tf),
        in_specs=[
            pl.BlockSpec((tm, D), lambda m, f: (m, 0)),
            pl.BlockSpec((1, D), lambda m, f: (0, 0)),
            pl.BlockSpec((1, D), lambda m, f: (0, 0)),
            pl.BlockSpec((D, tf), lambda m, f: (0, f)),
            pl.BlockSpec((1, tf), lambda m, f: (0, f)),
            pl.BlockSpec((tf, D), lambda m, f: (f, 0)),
            pl.BlockSpec((1, D), lambda m, f: (0, 0)),
        ],
        out_specs=pl.BlockSpec((tm, D), lambda m, f: (m, 0)),
        scratch_shapes=[pltpu.VMEM((tm, D), jnp.float32),
                        pltpu.VMEM((tm, D), jnp.bfloat16)],
        compiler_params=pltpu.CompilerParams(
            dimension_semantics=("parallel", "arbitrary"),
            vmem_limit_bytes=_VMEM_LIMIT),
    )(xp,
      ln_g.reshape(1, D).astype(jnp.float32),
      ln_b.reshape(1, D).astype(jnp.float32),
      w1p, b1p, w2p,
      b2.reshape(1, D).astype(jnp.float32))
    return out[:M] if Mp != M else out


def retention_block(x, q, k, v, g, wo_h, sin, cos, *, eps=1e-5):
    """Fused per-(batch, head) retention + group norm + gate + out_proj + residual."""
    B, S, D = x.shape
    H, dk = q.shape[1], q.shape[-1]
    dv = v.shape[-1]
    return pl.pallas_call(
        functools.partial(_retention_kernel, eps=eps),
        out_shape=jax.ShapeDtypeStruct((B, S, D), jnp.bfloat16),
        grid=(B, H),
        in_specs=[
            pl.BlockSpec((None, S, D), lambda b, h: (b, 0, 0)),            # x (residual)
            pl.BlockSpec((None, None, S, dk), lambda b, h: (b, h, 0, 0)),  # q[b,h]
            pl.BlockSpec((None, None, S, dk), lambda b, h: (b, h, 0, 0)),  # k[b,h]
            pl.BlockSpec((None, None, S, dv), lambda b, h: (b, h, 0, 0)),  # v[b,h]
            pl.BlockSpec((None, None, S, dv), lambda b, h: (b, h, 0, 0)),  # g[b,h]
            pl.BlockSpec((None, dv, D), lambda b, h: (h, 0, 0)),           # wo[h]
            pl.BlockSpec((S, dk // 2), lambda b, h: (0, 0)),               # sin (resident)
            pl.BlockSpec((S, dk // 2), lambda b, h: (0, 0)),               # cos (resident)
        ],
        out_specs=pl.BlockSpec((None, S, D), lambda b, h: (b, 0, 0)),
        scratch_shapes=[pltpu.VMEM((S, D), jnp.float32)],
        compiler_params=pltpu.CompilerParams(
            dimension_semantics=("parallel", "arbitrary"),
            vmem_limit_bytes=_VMEM_LIMIT),
    )(x, q, k, v, g, wo_h, sin, cos)


# ------------------------------- JAX glue ------------------------------------

def rel_pos(S, dk):
    """xpos angles (un-repeated, rotate-half form)."""
    angle = 1.0 / (10000.0 ** jnp.linspace(0.0, 1.0, dk // 2))      # (dk/2,)
    idx = jnp.arange(S, dtype=jnp.float32)
    sin = jnp.sin(idx[:, None] * angle[None, :])                    # (S, dk/2)
    cos = jnp.cos(idx[:, None] * angle[None, :])
    return sin, cos


def init_params(key, cfg):
    D = cfg["embed_dim"]
    Vd = cfg["value_embed_dim"]
    Fd = cfg["ffn_dim"]
    vocab = cfg["vocab_size"]
    L = cfg["layers"]
    keys = iter(jax.random.split(key, 8 * L + 4))

    def nrm(shape, std=0.02):
        return std * jax.random.normal(next(keys), shape, dtype=jnp.float32)

    embed = nrm((vocab, D))
    embed = embed.at[0].set(0.0)  # padding_idx=0

    layers = []
    for _ in range(L):
        layers.append(dict(
            ln1_g=jnp.ones((D,), jnp.float32), ln1_b=jnp.zeros((D,), jnp.float32),
            wq=nrm((D, D)), wk=nrm((D, D)),
            wv=nrm((D, Vd)), wg=nrm((D, Vd)),
            wo=nrm((Vd, D)),
            ln2_g=jnp.ones((D,), jnp.float32), ln2_b=jnp.zeros((D,), jnp.float32),
            fc1_w=nrm((D, Fd)), fc1_b=jnp.zeros((Fd,), jnp.float32),
            fc2_w=nrm((Fd, D)), fc2_b=jnp.zeros((D,), jnp.float32),
        ))
    return dict(
        embed=embed, layers=layers,
        lnf_g=jnp.ones((D,), jnp.float32), lnf_b=jnp.zeros((D,), jnp.float32),
        out_w=nrm((D, vocab), std=D ** -0.5),
    )


def prepare_params(params, cfg):
    """Fold xpos de-interleave and k-scaling into the weights; cast matmul
    weights to bf16; fuse q/k/v/g into one combined projection weight; reshape
    out_proj to per-head (H, dv, D)."""
    D = cfg["embed_dim"]
    Vd = cfg["value_embed_dim"]
    H = cfg["retention_heads"]
    dk = D // H
    dv = Vd // H
    scaling = dk ** -0.5

    # Per-head de-interleave permutation: [even features, odd features].
    perm = []
    for h in range(H):
        perm.extend(range(h * dk, (h + 1) * dk, 2))
        perm.extend(range(h * dk + 1, (h + 1) * dk, 2))
    perm = jnp.array(perm, dtype=jnp.int32)

    layers = []
    for lp in params["layers"]:
        wq = lp["wq"][:, perm]
        wk = lp["wk"][:, perm] * scaling
        w_qkvg = jnp.concatenate([wq, wk, lp["wv"], lp["wg"]], axis=1)
        layers.append(dict(
            ln1_g=lp["ln1_g"], ln1_b=lp["ln1_b"],
            w_qkvg=w_qkvg.astype(jnp.bfloat16),
            wo=lp["wo"].reshape(H, dv, D).astype(jnp.bfloat16),
            ln2_g=lp["ln2_g"], ln2_b=lp["ln2_b"],
            fc1_w=lp["fc1_w"].astype(jnp.bfloat16), fc1_b=lp["fc1_b"],
            fc2_w=lp["fc2_w"].astype(jnp.bfloat16), fc2_b=lp["fc2_b"],
        ))
    return dict(
        embed=params["embed"], layers=layers,
        lnf_g=params["lnf_g"], lnf_b=params["lnf_b"],
        out_w=params["out_w"].astype(jnp.bfloat16),
    )


def retnet_forward(tokens, params, cfg):
    B, S = tokens.shape
    D = cfg["embed_dim"]
    Vd = cfg["value_embed_dim"]
    H = cfg["retention_heads"]
    vocab = cfg["vocab_size"]
    dk, dv = D // H, Vd // H
    eps = 1e-5

    # TODO(synk): embedding gather kept in XLA.
    x = (jnp.take(params["embed"], tokens, axis=0) * math.sqrt(D)
         ).astype(jnp.bfloat16)                                     # (B, S, D)
    sin, cos = rel_pos(S, dk)

    for lp in params["layers"]:
        # --- Multi-Scale Retention block (pre-norm) ---
        qkvg = ln_matmul(x.reshape(B * S, D), lp["ln1_g"], lp["ln1_b"],
                         lp["w_qkvg"], out_dtype=jnp.bfloat16, eps=eps)
        qkvg = qkvg.reshape(B, S, 2 * D + 2 * Vd)
        # head-major relayout (XLA).  TODO(synk): fold into the projection store.
        q = qkvg[..., :D].reshape(B, S, H, dk).transpose(0, 2, 1, 3)
        k = qkvg[..., D:2 * D].reshape(B, S, H, dk).transpose(0, 2, 1, 3)
        v = qkvg[..., 2 * D:2 * D + Vd].reshape(B, S, H, dv).transpose(0, 2, 1, 3)
        g = qkvg[..., 2 * D + Vd:].reshape(B, S, H, dv).transpose(0, 2, 1, 3)
        x = retention_block(x, q, k, v, g, lp["wo"], sin, cos, eps=eps)

        # --- Feed-forward block (pre-norm), 1 fused kernel ---
        x = ffn_block(x.reshape(B * S, D), lp["ln2_g"], lp["ln2_b"],
                      lp["fc1_w"], lp["fc1_b"], lp["fc2_w"], lp["fc2_b"],
                      eps=eps).reshape(B, S, D)

    logits = ln_matmul(x.reshape(B * S, D), params["lnf_g"], params["lnf_b"],
                       params["out_w"], out_dtype=jnp.float32, eps=eps)
    return logits.reshape(B, S, vocab)


# --------------------------------- main ---------------------------------------

if __name__ == "__main__":
    cfg = dict(
        embed_dim=32, value_embed_dim=32, retention_heads=2, ffn_dim=64,
        layers=2, dropout=0.0, activation_dropout=0.0, vocab_size=32,
        fsdp=False, max_seq_len=16,
    )
    B, S = 2, 8

    key = jax.random.PRNGKey(0)
    pkey, tkey = jax.random.split(key)
    params = prepare_params(init_params(pkey, cfg), cfg)
    tokens = jax.random.randint(tkey, (B, S), 0, cfg["vocab_size"], dtype=jnp.int32)

    fwd = jax.jit(lambda t, p: retnet_forward(t, p, cfg))
    logits = fwd(tokens, params)
    jax.block_until_ready(logits)

    assert logits.shape == (B, S, cfg["vocab_size"]), logits.shape
    assert bool(jnp.all(jnp.isfinite(logits)))
    print("KERNEL_OK")
</pallas_src>

<mosaic_0001>
module attributes {stable_mosaic.version = 11 : i64} {
  func.func @_ln_mm_kernel(%arg0: i32, %arg1: i32, %arg2: memref<16x32xbf16, #tpu.memory_space<vmem>>, %arg3: memref<1x32xf32, #tpu.memory_space<vmem>>, %arg4: memref<1x32xf32, #tpu.memory_space<vmem>>, %arg5: memref<32x128xbf16, #tpu.memory_space<vmem>>, %arg6: memref<16x128xbf16, #tpu.memory_space<vmem>>, %arg7: memref<16x32xbf16, #tpu.memory_space<vmem>>) attributes {dimension_semantics = [#tpu.dimension_semantics<parallel>, #tpu.dimension_semantics<arbitrary>], iteration_bounds = array<i64: 1, 1>, scalar_prefetch = 0 : i64, scratch_operands = 1 : i64, tpu.core_type = #tpu.core_type<tc>, window_params = [{transform_indices = @transform_0, window_bounds = array<i64: 16, 32>}, {pipeline_mode = #tpu.pipeline_mode<synchronous>, transform_indices = @transform_1, window_bounds = array<i64: 1, 32>}, {pipeline_mode = #tpu.pipeline_mode<synchronous>, transform_indices = @transform_2, window_bounds = array<i64: 1, 32>}, {transform_indices = @transform_3, window_bounds = array<i64: 32, 128>}, {transform_indices = @transform_4, window_bounds = array<i64: 16, 128>}]} {
    %c0_i32 = arith.constant 0 : i32
    %0 = arith.cmpi eq, %arg1, %c0_i32 : i32
    %1 = arith.extui %0 : i1 to i32
    %c0_i32_0 = arith.constant 0 : i32
    %2 = arith.cmpi ne, %1, %c0_i32_0 : i32
    scf.if %2 {
      %c0_6 = arith.constant 0 : index
      %c0_7 = arith.constant 0 : index
      %8 = vector.load %arg2[%c0_6, %c0_7] : memref<16x32xbf16, #tpu.memory_space<vmem>>, vector<16x32xbf16>
      %9 = arith.extf %8 : vector<16x32xbf16> to vector<16x32xf32>
      %cst_8 = arith.constant dense<0.000000e+00> : vector<16xf32>
      %10 = vector.multi_reduction <add>, %9, %cst_8 [1] : vector<16x32xf32> to vector<16xf32>
      %11 = vector.shape_cast %10 : vector<16xf32> to vector<16x1xf32>
      %cst_9 = arith.constant 3.200000e+01 : f32
      %12 = vector.broadcast %cst_9 : f32 to vector<16x1xf32>
      %13 = arith.divf %11, %12 : vector<16x1xf32>
      %14 = vector.broadcast %13 : vector<16x1xf32> to vector<16x32xf32>
      %15 = arith.subf %9, %14 : vector<16x32xf32>
      %16 = arith.mulf %15, %15 : vector<16x32xf32>
      %cst_10 = arith.constant dense<0.000000e+00> : vector<16xf32>
      %17 = vector.multi_reduction <add>, %16, %cst_10 [1] : vector<16x32xf32> to vector<16xf32>
      %18 = vector.shape_cast %17 : vector<16xf32> to vector<16x1xf32>
      %cst_11 = arith.constant 3.200000e+01 : f32
      %19 = vector.broadcast %cst_11 : f32 to vector<16x1xf32>
      %20 = arith.divf %18, %19 : vector<16x1xf32>
      %cst_12 = arith.constant 9.99999974E-6 : f32
      %21 = vector.broadcast %cst_12 : f32 to vector<16x1xf32>
      %22 = arith.addf %20, %21 : vector<16x1xf32>
      %23 = math.rsqrt %22 : vector<16x1xf32>
      %24 = vector.broadcast %23 : vector<16x1xf32> to vector<16x32xf32>
      %25 = arith.mulf %15, %24 : vector<16x32xf32>
      %c0_13 = arith.constant 0 : index
      %c0_14 = arith.constant 0 : index
      %26 = vector.load %arg3[%c0_13, %c0_14] : memref<1x32xf32, #tpu.memory_space<vmem>>, vector<1x32xf32>
      %27 = vector.broadcast %26 : vector<1x32xf32> to vector<16x32xf32>
      %28 = arith.mulf %25, %27 : vector<16x32xf32>
      %c0_15 = arith.constant 0 : index
      %c0_16 = arith.constant 0 : index
      %29 = vector.load %arg4[%c0_15, %c0_16] : memref<1x32xf32, #tpu.memory_space<vmem>>, vector<1x32xf32>
      %30 = vector.broadcast %29 : vector<1x32xf32> to vector<16x32xf32>
      %31 = arith.addf %28, %30 : vector<16x32xf32>
      %32 = arith.truncf %31 : vector<16x32xf32> to vector<16x32xbf16>
      %c0_17 = arith.constant 0 : index
      %c0_18 = arith.constant 0 : index
      %33 = vector.load %arg7[%c0_17, %c0_18] : memref<16x32xbf16, #tpu.memory_space<vmem>>, vector<16x32xbf16>
      tpu.vector_store %arg7[%c0_17, %c0_18], %32 {strides = array<i32>} : memref<16x32xbf16, #tpu.memory_space<vmem>>, vector<16x32xbf16>,
    } else {
    }
    %c0 = arith.constant 0 : index
    %c0_1 = arith.constant 0 : index
    %3 = vector.load %arg7[%c0, %c0_1] : memref<16x32xbf16, #tpu.memory_space<vmem>>, vector<16x32xbf16>
    %c0_2 = arith.constant 0 : index
    %c0_3 = arith.constant 0 : index
    %4 = vector.load %arg5[%c0_2, %c0_3] : memref<32x128xbf16, #tpu.memory_space<vmem>>, vector<32x128xbf16>
    %cst = arith.constant dense<0.000000e+00> : vector<16x128xf32>
    %5 = tpu.matmul %3, %4, %cst {dimension_numbers = #tpu.dot_dimension_numbers<[1], [0], [0], [1], [0, 0, 1, 1], [], []>} : vector<16x32xbf16>, vector<32x128xbf16>, vector<16x128xf32> -> vector<16x128xf32>
    %6 = arith.truncf %5 : vector<16x128xf32> to vector<16x128xbf16>
    %c0_4 = arith.constant 0 : index
    %c0_5 = arith.constant 0 : index
    %7 = vector.load %arg6[%c0_4, %c0_5] : memref<16x128xbf16, #tpu.memory_space<vmem>>, vector<16x128xbf16>
    tpu.vector_store %arg6[%c0_4, %c0_5], %6 {strides = array<i32>} : memref<16x128xbf16, #tpu.memory_space<vmem>>, vector<16x128xbf16>,
    return
  }
  func.func @transform_0(%arg0: i32, %arg1: i32) -> (i32, i32) {
    %c0_i32 = arith.constant 0 : i32
    %c0_i32_0 = arith.constant 0 : i32
    return %arg0, %c0_i32 : i32, i32
  }
  func.func @transform_1(%arg0: i32, %arg1: i32) -> (i32, i32) {
    %c0_i32 = arith.constant 0 : i32
    %c0_i32_0 = arith.constant 0 : i32
    %c0_i32_1 = arith.constant 0 : i32
    return %c0_i32, %c0_i32_0 : i32, i32
  }
  func.func @transform_2(%arg0: i32, %arg1: i32) -> (i32, i32) {
    %c0_i32 = arith.constant 0 : i32
    %c0_i32_0 = arith.constant 0 : i32
    %c0_i32_1 = arith.constant 0 : i32
    return %c0_i32, %c0_i32_0 : i32, i32
  }
  func.func @transform_3(%arg0: i32, %arg1: i32) -> (i32, i32) {
    %c0_i32 = arith.constant 0 : i32
    %c0_i32_0 = arith.constant 0 : i32
    return %c0_i32, %arg1 : i32, i32
  }
  func.func @transform_4(%arg0: i32, %arg1: i32) -> (i32, i32) {
    %c0_i32 = arith.constant 0 : i32
    return %arg0, %arg1 : i32, i32
  }
}

module attributes {stable_mosaic.version = 11 : i64} {
  func.func @_retention_kernel(%arg0: i32, %arg1: i32, %arg2: memref<1x8x32xbf16, #tpu.memory_space<vmem>>, %arg3: memref<1x1x8x16xbf16, #tpu.memory_space<vmem>>, %arg4: memref<1x1x8x16xbf16, #tpu.memory_space<vmem>>, %arg5: memref<1x1x8x16xbf16, #tpu.memory_space<vmem>>, %arg6: memref<1x1x8x16xbf16, #tpu.memory_space<vmem>>, %arg7: memref<1x16x32xbf16, #tpu.memory_space<vmem>>, %arg8: memref<8x8xf32, #tpu.memory_space<vmem>>, %arg9: memref<8x8xf32, #tpu.memory_space<vmem>>, %arg10: memref<1x8x32xbf16, #tpu.memory_space<vmem>>, %arg11: memref<8x32xf32, #tpu.memory_space<vmem>>) attributes {dimension_semantics = [#tpu.dimension_semantics<parallel>, #tpu.dimension_semantics<arbitrary>], iteration_bounds = array<i64: 2, 2>, scalar_prefetch = 0 : i64, scratch_operands = 1 : i64, tpu.core_type = #tpu.core_type<tc>, window_params = [{transform_indices = @transform_0, window_bounds = array<i64: 1, 8, 32>}, {transform_indices = @transform_1, window_bounds = array<i64: 1, 1, 8, 16>}, {transform_indices = @transform_2, window_bounds = array<i64: 1, 1, 8, 16>}, {transform_indices = @transform_3, window_bounds = array<i64: 1, 1, 8, 16>}, {transform_indices = @transform_4, window_bounds = array<i64: 1, 1, 8, 16>}, {transform_indices = @transform_5, window_bounds = array<i64: 1, 16, 32>}, {pipeline_mode = #tpu.pipeline_mode<synchronous>, transform_indices = @transform_6, window_bounds = array<i64: 8, 8>}, {pipeline_mode = #tpu.pipeline_mode<synchronous>, transform_indices = @transform_7, window_bounds = array<i64: 8, 8>}, {transform_indices = @transform_8, window_bounds = array<i64: 1, 8, 32>}]} {
    %c0_i32 = arith.constant 0 : i32
    %0 = arith.cmpi eq, %arg1, %c0_i32 : i32
    %1 = arith.extui %0 : i1 to i32
    %c0_i32_0 = arith.constant 0 : i32
    %2 = arith.cmpi ne, %1, %c0_i32_0 : i32
    scf.if %2 {
      %c0_45 = arith.constant 0 : index
      %c0_46 = arith.constant 0 : index
      %c0_47 = arith.constant 0 : index
      %120 = vector.load %arg2[%c0_45, %c0_46, %c0_47] : memref<1x8x32xbf16, #tpu.memory_space<vmem>>, vector<1x8x32xbf16>
      %121 = vector.shape_cast %120 : vector<1x8x32xbf16> to vector<8x32xbf16>
      %122 = arith.extf %121 : vector<8x32xbf16> to vector<8x32xf32>
      %c0_48 = arith.constant 0 : index
      %c0_49 = arith.constant 0 : index
      %123 = vector.load %arg11[%c0_48, %c0_49] : memref<8x32xf32, #tpu.memory_space<vmem>>, vector<8x32xf32>
      tpu.vector_store %arg11[%c0_48, %c0_49], %122 {strides = array<i32>} : memref<8x32xf32, #tpu.memory_space<vmem>>, vector<8x32xf32>,
    } else {
    }
    %c0 = arith.constant 0 : index
    %c0_1 = arith.constant 0 : index
    %3 = vector.load %arg8[%c0, %c0_1] : memref<8x8xf32, #tpu.memory_space<vmem>>, vector<8x8xf32>
    %c0_2 = arith.constant 0 : index
    %c0_3 = arith.constant 0 : index
    %4 = vector.load %arg9[%c0_2, %c0_3] : memref<8x8xf32, #tpu.memory_space<vmem>>, vector<8x8xf32>
    %c0_4 = arith.constant 0 : index
    %c0_5 = arith.constant 0 : index
    %c0_6 = arith.constant 0 : index
    %c0_7 = arith.constant 0 : index
    %5 = vector.load %arg3[%c0_4, %c0_5, %c0_6, %c0_7] : memref<1x1x8x16xbf16, #tpu.memory_space<vmem>>, vector<1x1x8x16xbf16>
    %6 = vector.shape_cast %5 : vector<1x1x8x16xbf16> to vector<8x16xbf16>
    %7 = arith.extf %6 : vector<8x16xbf16> to vector<8x16xf32>
    %c0_8 = arith.constant 0 : index
    %c0_9 = arith.constant 0 : index
    %c0_10 = arith.constant 0 : index
    %c0_11 = arith.constant 0 : index
    %8 = vector.load %arg4[%c0_8, %c0_9, %c0_10, %c0_11] : memref<1x1x8x16xbf16, #tpu.memory_space<vmem>>, vector<1x1x8x16xbf16>
    %9 = vector.shape_cast %8 : vector<1x1x8x16xbf16> to vector<8x16xbf16>
    %10 = arith.extf %9 : vector<8x16xbf16> to vector<8x16xf32>
    %11 = vector.extract_strided_slice %7 {offsets = [0, 0], sizes = [8, 8], strides = [1, 1]} : vector<8x16xf32> to vector<8x8xf32>
    %12 = vector.extract_strided_slice %7 {offsets = [0, 8], sizes = [8, 8], strides = [1, 1]} : vector<8x16xf32> to vector<8x8xf32>
    %13 = vector.extract_strided_slice %10 {offsets = [0, 0], sizes = [8, 8], strides = [1, 1]} : vector<8x16xf32> to vector<8x8xf32>
    %14 = vector.extract_strided_slice %10 {offsets = [0, 8], sizes = [8, 8], strides = [1, 1]} : vector<8x16xf32> to vector<8x8xf32>
    %15 = arith.mulf %11, %4 : vector<8x8xf32>
    %16 = arith.mulf %12, %3 : vector<8x8xf32>
    %17 = arith.subf %15, %16 : vector<8x8xf32>
    %18 = arith.mulf %12, %4 : vector<8x8xf32>
    %19 = arith.mulf %11, %3 : vector<8x8xf32>
    %20 = arith.addf %18, %19 : vector<8x8xf32>
    %21 = tpu.concatenate %17, %20 in 1 : vector<8x8xf32>, vector<8x8xf32> -> vector<8x16xf32>
    %22 = arith.mulf %13, %4 : vector<8x8xf32>
    %23 = arith.mulf %14, %3 : vector<8x8xf32>
    %24 = arith.subf %22, %23 : vector<8x8xf32>
    %25 = arith.mulf %14, %4 : vector<8x8xf32>
    %26 = arith.mulf %13, %3 : vector<8x8xf32>
    %27 = arith.addf %25, %26 : vector<8x8xf32>
    %28 = tpu.concatenate %24, %27 in 1 : vector<8x8xf32>, vector<8x8xf32> -> vector<8x16xf32>
    %29 = arith.truncf %21 : vector<8x16xf32> to vector<8x16xbf16>
    %30 = arith.truncf %28 : vector<8x16xf32> to vector<8x16xbf16>
    %31 = tpu.transpose %30, [1, 0] : vector<8x16xbf16> -> vector<16x8xbf16>
    %cst = arith.constant dense<0.000000e+00> : vector<8x8xf32>
    %32 = tpu.matmul %29, %31, %cst {dimension_numbers = #tpu.dot_dimension_numbers<[1], [0], [0], [1], [0, 0, 1, 1], [], []>} : vector<8x16xbf16>, vector<16x8xbf16>, vector<8x8xf32> -> vector<8x8xf32>
    %33 = arith.sitofp %arg1 : i32 to f32
    %34 = vector.broadcast %33 : f32 to vector<1x1xf32>
    %cst_12 = arith.constant -5.000000e+00 : f32
    %35 = vector.broadcast %cst_12 : f32 to vector<1x1xf32>
    %36 = arith.subf %35, %34 : vector<1x1xf32>
    %cst_13 = arith.constant 0.693147182 : f32
    %37 = vector.broadcast %cst_13 : f32 to vector<1x1xf32>
    %38 = arith.mulf %36, %37 : vector<1x1xf32>
    %39 = math.exp %38 : vector<1x1xf32>
    %cst_14 = arith.constant 1.000000e+00 : f32
    %40 = vector.broadcast %cst_14 : f32 to vector<1x1xf32>
    %41 = arith.subf %40, %39 : vector<1x1xf32>
    %42 = math.log %41 : vector<1x1xf32>
    %43 = tpu.iota {dimensions = array<i32: 0>} : vector<8x1xi32>
    %44 = arith.sitofp %43 : vector<8x1xi32> to vector<8x1xf32>
    %45 = tpu.iota {dimensions = array<i32: 1>} : vector<1x8xi32>
    %46 = arith.sitofp %45 : vector<1x8xi32> to vector<1x8xf32>
    %cst_15 = arith.constant 3.500000e+00 : f32
    %47 = vector.broadcast %cst_15 : f32 to vector<8x1xf32>
    %48 = arith.subf %44, %47 : vector<8x1xf32>
    %49 = vector.broadcast %42 : vector<1x1xf32> to vector<8x1xf32>
    %50 = arith.mulf %48, %49 : vector<8x1xf32>
    %51 = math.exp %50 : vector<8x1xf32>
    %cst_16 = arith.constant 3.500000e+00 : f32
    %52 = vector.broadcast %cst_16 : f32 to vector<1x8xf32>
    %53 = arith.subf %52, %46 : vector<1x8xf32>
    %54 = vector.broadcast %42 : vector<1x1xf32> to vector<1x8xf32>
    %55 = arith.mulf %53, %54 : vector<1x8xf32>
    %56 = math.exp %55 : vector<1x8xf32>
    %57 = tpu.iota {dimensions = array<i32: 0>} : vector<8x8xi32>
    %58 = tpu.iota {dimensions = array<i32: 1>} : vector<8x8xi32>
    %59 = arith.cmpi sge, %57, %58 : vector<8x8xi32>
    %60 = vector.broadcast %51 : vector<8x1xf32> to vector<8x8xf32>
    %61 = vector.broadcast %56 : vector<1x8xf32> to vector<8x8xf32>
    %62 = arith.mulf %60, %61 : vector<8x8xf32>
    %cst_17 = arith.constant 0.000000e+00 : f32
    %63 = vector.broadcast %cst_17 : f32 to vector<8x8xf32>
    %64 = arith.select %59, %62, %63 : vector<8x8xi1>, vector<8x8xf32>
    %65 = arith.mulf %32, %64 : vector<8x8xf32>
    %66 = math.exp %42 : vector<1x1xf32>
    %cst_18 = arith.constant 1.000000e+00 : f32
    %67 = vector.broadcast %cst_18 : f32 to vector<8x1xf32>
    %68 = arith.addf %44, %67 : vector<8x1xf32>
    %69 = vector.broadcast %42 : vector<1x1xf32> to vector<8x1xf32>
    %70 = arith.mulf %68, %69 : vector<8x1xf32>
    %71 = math.exp %70 : vector<8x1xf32>
    %cst_19 = arith.constant 1.000000e+00 : f32
    %72 = vector.broadcast %cst_19 : f32 to vector<8x1xf32>
    %73 = arith.subf %72, %71 : vector<8x1xf32>
    %cst_20 = arith.constant 1.000000e+00 : f32
    %74 = vector.broadcast %cst_20 : f32 to vector<1x1xf32>
    %75 = arith.subf %74, %66 : vector<1x1xf32>
    %76 = vector.broadcast %75 : vector<1x1xf32> to vector<8x1xf32>
    %77 = arith.divf %73, %76 : vector<8x1xf32>
    %78 = math.absf %65 : vector<8x8xf32>
    %cst_21 = arith.constant dense<0.000000e+00> : vector<8xf32>
    %79 = vector.multi_reduction <add>, %78, %cst_21 [1] : vector<8x8xf32> to vector<8xf32>
    %80 = vector.shape_cast %79 : vector<8xf32> to vector<8x1xf32>
    %81 = math.sqrt %77 : vector<8x1xf32>
    %82 = arith.maximumf %80, %81 : vector<8x1xf32>
    %83 = tpu.reciprocal %82 {approx = true} : vector<8x1xf32> -> vector<8x1xf32>
    %84 = vector.broadcast %83 : vector<8x1xf32> to vector<8x8xf32>
    %85 = arith.mulf %65, %84 : vector<8x8xf32>
    %86 = arith.truncf %85 : vector<8x8xf32> to vector<8x8xbf16>
    %c0_22 = arith.constant 0 : index
    %c0_23 = arith.constant 0 : index
    %c0_24 = arith.constant 0 : index
    %c0_25 = arith.constant 0 : index
    %87 = vector.load %arg5[%c0_22, %c0_23, %c0_24, %c0_25] : memref<1x1x8x16xbf16, #tpu.memory_space<vmem>>, vector<1x1x8x16xbf16>
    %88 = vector.shape_cast %87 : vector<1x1x8x16xbf16> to vector<8x16xbf16>
    %cst_26 = arith.constant dense<0.000000e+00> : vector<8x16xf32>
    %89 = tpu.matmul %86, %88, %cst_26 {dimension_numbers = #tpu.dot_dimension_numbers<[1], [0], [0], [1], [0, 0, 1, 1], [], []>} : vector<8x8xbf16>, vector<8x16xbf16>, vector<8x16xf32> -> vector<8x16xf32>
    %90 = arith.mulf %89, %89 : vector<8x16xf32>
    %cst_27 = arith.constant dense<0.000000e+00> : vector<8xf32>
    %91 = vector.multi_reduction <add>, %90, %cst_27 [1] : vector<8x16xf32> to vector<8xf32>
    %92 = vector.shape_cast %91 : vector<8xf32> to vector<8x1xf32>
    %cst_28 = arith.constant 1.600000e+01 : f32
    %93 = vector.broadcast %cst_28 : f32 to vector<8x1xf32>
    %94 = arith.divf %92, %93 : vector<8x1xf32>
    %cst_29 = arith.constant 9.99999974E-6 : f32
    %95 = vector.broadcast %cst_29 : f32 to vector<8x1xf32>
    %96 = arith.addf %94, %95 : vector<8x1xf32>
    %97 = math.rsqrt %96 : vector<8x1xf32>
    %98 = vector.broadcast %97 : vector<8x1xf32> to vector<8x16xf32>
    %99 = arith.mulf %89, %98 : vector<8x16xf32>
    %c0_30 = arith.constant 0 : index
    %c0_31 = arith.constant 0 : index
    %c0_32 = arith.constant 0 : index
    %c0_33 = arith.constant 0 : index
    %100 = vector.load %arg6[%c0_30, %c0_31, %c0_32, %c0_33] : memref<1x1x8x16xbf16, #tpu.memory_space<vmem>>, vector<1x1x8x16xbf16>
    %101 = vector.shape_cast %100 : vector<1x1x8x16xbf16> to vector<8x16xbf16>
    %102 = arith.extf %101 : vector<8x16xbf16> to vector<8x16xf32>
    %cst_34 = arith.constant 0.000000e+00 : f32
    %103 = vector.broadcast %cst_34 : f32 to vector<8x16xf32>
    %104 = arith.subf %103, %102 : vector<8x16xf32>
    %105 = math.exp %104 : vector<8x16xf32>
    %cst_35 = arith.constant 1.000000e+00 : f32
    %106 = vector.broadcast %cst_35 : f32 to vector<8x16xf32>
    %107 = arith.addf %106, %105 : vector<8x16xf32>
    %108 = arith.divf %102, %107 : vector<8x16xf32>
    %109 = arith.mulf %99, %108 : vector<8x16xf32>
    %c0_36 = arith.constant 0 : index
    %c0_37 = arith.constant 0 : index
    %110 = vector.load %arg11[%c0_36, %c0_37] : memref<8x32xf32, #tpu.memory_space<vmem>>, vector<8x32xf32>
    %111 = arith.truncf %109 : vector<8x16xf32> to vector<8x16xbf16>
    %c0_38 = arith.constant 0 : index
    %c0_39 = arith.constant 0 : index
    %c0_40 = arith.constant 0 : index
    %112 = vector.load %arg7[%c0_38, %c0_39, %c0_40] : memref<1x16x32xbf16, #tpu.memory_space<vmem>>, vector<1x16x32xbf16>
    %113 = vector.shape_cast %112 : vector<1x16x32xbf16> to vector<16x32xbf16>
    %cst_41 = arith.constant dense<0.000000e+00> : vector<8x32xf32>
    %114 = tpu.matmul %111, %113, %cst_41 {dimension_numbers = #tpu.dot_dimension_numbers<[1], [0], [0], [1], [0, 0, 1, 1], [], []>} : vector<8x16xbf16>, vector<16x32xbf16>, vector<8x32xf32> -> vector<8x32xf32>
    %115 = arith.addf %110, %114 : vector<8x32xf32>
    %c0_42 = arith.constant 0 : index
    %c0_43 = arith.constant 0 : index
    %116 = vector.load %arg11[%c0_42, %c0_43] : memref<8x32xf32, #tpu.memory_space<vmem>>, vector<8x32xf32>
    tpu.vector_store %arg11[%c0_42, %c0_43], %115 {strides = array<i32>} : memref<8x32xf32, #tpu.memory_space<vmem>>, vector<8x32xf32>,
    %c1_i32 = arith.constant 1 : i32
    %117 = arith.cmpi eq, %arg1, %c1_i32 : i32
    %118 = arith.extui %117 : i1 to i32
    %c0_i32_44 = arith.constant 0 : i32
    %119 = arith.cmpi ne, %118, %c0_i32_44 : i32
    scf.if %119 {
      %c0_45 = arith.constant 0 : index
      %c0_46 = arith.constant 0 : index
      %120 = vector.load %arg11[%c0_45, %c0_46] : memref<8x32xf32, #tpu.memory_space<vmem>>, vector<8x32xf32>
      %121 = arith.truncf %120 : vector<8x32xf32> to vector<8x32xbf16>
      %c0_47 = arith.constant 0 : index
      %c0_48 = arith.constant 0 : index
      %c0_49 = arith.constant 0 : index
      %122 = vector.load %arg10[%c0_47, %c0_48, %c0_49] : memref<1x8x32xbf16, #tpu.memory_space<vmem>>, vector<1x8x32xbf16>
      %123 = vector.shape_cast %122 : vector<1x8x32xbf16> to vector<8x32xbf16>
      %124 = vector.shape_cast %121 : vector<8x32xbf16> to vector<1x8x32xbf16>
      tpu.vector_store %arg10[%c0_47, %c0_48, %c0_49], %124 {strides = array<i32>} : memref<1x8x32xbf16, #tpu.memory_space<vmem>>, vector<1x8x32xbf16>,
    } else {
    }
    return
  }
  func.func @transform_0(%arg0: i32, %arg1: i32) -> (i32, i32, i32) {
    %c0_i32 = arith.constant 0 : i32
    %c0_i32_0 = arith.constant 0 : i32
    %c0_i32_1 = arith.constant 0 : i32
    return %arg0, %c0_i32, %c0_i32_0 : i32, i32, i32
  }
  func.func @transform_1(%arg0: i32, %arg1: i32) -> (i32, i32, i32, i32) {
    %c0_i32 = arith.constant 0 : i32
    %c0_i32_0 = arith.constant 0 : i32
    %c0_i32_1 = arith.constant 0 : i32
    return %arg0, %arg1, %c0_i32, %c0_i32_0 : i32, i32, i32, i32
  }
  func.func @transform_2(%arg0: i32, %arg1: i32) -> (i32, i32, i32, i32) {
    %c0_i32 = arith.constant 0 : i32
    %c0_i32_0 = arith.constant 0 : i32
    %c0_i32_1 = arith.constant 0 : i32
    return %arg0, %arg1, %c0_i32, %c0_i32_0 : i32, i32, i32, i32
  }
  func.func @transform_3(%arg0: i32, %arg1: i32) -> (i32, i32, i32, i32) {
    %c0_i32 = arith.constant 0 : i32
    %c0_i32_0 = arith.constant 0 : i32
    %c0_i32_1 = arith.constant 0 : i32
    return %arg0, %arg1, %c0_i32, %c0_i32_0 : i32, i32, i32, i32
  }
  func.func @transform_4(%arg0: i32, %arg1: i32) -> (i32, i32, i32, i32) {
    %c0_i32 = arith.constant 0 : i32
    %c0_i32_0 = arith.constant 0 : i32
    %c0_i32_1 = arith.constant 0 : i32
    return %arg0, %arg1, %c0_i32, %c0_i32_0 : i32, i32, i32, i32
  }
  func.func @transform_5(%arg0: i32, %arg1: i32) -> (i32, i32, i32) {
    %c0_i32 = arith.constant 0 : i32
    %c0_i32_0 = arith.constant 0 : i32
    %c0_i32_1 = arith.constant 0 : i32
    return %arg1, %c0_i32, %c0_i32_0 : i32, i32, i32
  }
  func.func @transform_6(%arg0: i32, %arg1: i32) -> (i32, i32) {
    %c0_i32 = arith.constant 0 : i32
    %c0_i32_0 = arith.constant 0 : i32
    %c0_i32_1 = arith.constant 0 : i32
    return %c0_i32, %c0_i32_0 : i32, i32
  }
  func.func @transform_7(%arg0: i32, %arg1: i32) -> (i32, i32) {
    %c0_i32 = arith.constant 0 : i32
    %c0_i32_0 = arith.constant 0 : i32
    %c0_i32_1 = arith.constant 0 : i32
    return %c0_i32, %c0_i32_0 : i32, i32
  }
  func.func @transform_8(%arg0: i32, %arg1: i32) -> (i32, i32, i32) {
    %c0_i32 = arith.constant 0 : i32
    %c0_i32_0 = arith.constant 0 : i32
    %c0_i32_1 = arith.constant 0 : i32
    return %arg0, %c0_i32, %c0_i32_0 : i32, i32, i32
  }
}

module attributes {stable_mosaic.version = 11 : i64} {
  func.func @_ln_mm_kernel(%arg0: i32, %arg1: i32, %arg2: memref<16x32xbf16, #tpu.memory_space<vmem>>, %arg3: memref<1x32xf32, #tpu.memory_space<vmem>>, %arg4: memref<1x32xf32, #tpu.memory_space<vmem>>, %arg5: memref<32x32xbf16, #tpu.memory_space<vmem>>, %arg6: memref<16x32xf32, #tpu.memory_space<vmem>>, %arg7: memref<16x32xbf16, #tpu.memory_space<vmem>>) attributes {dimension_semantics = [#tpu.dimension_semantics<parallel>, #tpu.dimension_semantics<arbitrary>], iteration_bounds = array<i64: 1, 1>, scalar_prefetch = 0 : i64, scratch_operands = 1 : i64, tpu.core_type = #tpu.core_type<tc>, window_params = [{transform_indices = @transform_0, window_bounds = array<i64: 16, 32>}, {pipeline_mode = #tpu.pipeline_mode<synchronous>, transform_indices = @transform_1, window_bounds = array<i64: 1, 32>}, {pipeline_mode = #tpu.pipeline_mode<synchronous>, transform_indices = @transform_2, window_bounds = array<i64: 1, 32>}, {transform_indices = @transform_3, window_bounds = array<i64: 32, 32>}, {transform_indices = @transform_4, window_bounds = array<i64: 16, 32>}]} {
    %c0_i32 = arith.constant 0 : i32
    %0 = arith.cmpi eq, %arg1, %c0_i32 : i32
    %1 = arith.extui %0 : i1 to i32
    %c0_i32_0 = arith.constant 0 : i32
    %2 = arith.cmpi ne, %1, %c0_i32_0 : i32
    scf.if %2 {
      %c0_6 = arith.constant 0 : index
      %c0_7 = arith.constant 0 : index
      %7 = vector.load %arg2[%c0_6, %c0_7] : memref<16x32xbf16, #tpu.memory_space<vmem>>, vector<16x32xbf16>
      %8 = arith.extf %7 : vector<16x32xbf16> to vector<16x32xf32>
      %cst_8 = arith.constant dense<0.000000e+00> : vector<16xf32>
      %9 = vector.multi_reduction <add>, %8, %cst_8 [1] : vector<16x32xf32> to vector<16xf32>
      %10 = vector.shape_cast %9 : vector<16xf32> to vector<16x1xf32>
      %cst_9 = arith.constant 3.200000e+01 : f32
      %11 = vector.broadcast %cst_9 : f32 to vector<16x1xf32>
      %12 = arith.divf %10, %11 : vector<16x1xf32>
      %13 = vector.broadcast %12 : vector<16x1xf32> to vector<16x32xf32>
      %14 = arith.subf %8, %13 : vector<16x32xf32>
      %15 = arith.mulf %14, %14 : vector<16x32xf32>
      %cst_10 = arith.constant dense<0.000000e+00> : vector<16xf32>
      %16 = vector.multi_reduction <add>, %15, %cst_10 [1] : vector<16x32xf32> to vector<16xf32>
      %17 = vector.shape_cast %16 : vector<16xf32> to vector<16x1xf32>
      %cst_11 = arith.constant 3.200000e+01 : f32
      %18 = vector.broadcast %cst_11 : f32 to vector<16x1xf32>
      %19 = arith.divf %17, %18 : vector<16x1xf32>
      %cst_12 = arith.constant 9.99999974E-6 : f32
      %20 = vector.broadcast %cst_12 : f32 to vector<16x1xf32>
      %21 = arith.addf %19, %20 : vector<16x1xf32>
      %22 = math.rsqrt %21 : vector<16x1xf32>
      %23 = vector.broadcast %22 : vector<16x1xf32> to vector<16x32xf32>
      %24 = arith.mulf %14, %23 : vector<16x32xf32>
      %c0_13 = arith.constant 0 : index
      %c0_14 = arith.constant 0 : index
      %25 = vector.load %arg3[%c0_13, %c0_14] : memref<1x32xf32, #tpu.memory_space<vmem>>, vector<1x32xf32>
      %26 = vector.broadcast %25 : vector<1x32xf32> to vector<16x32xf32>
      %27 = arith.mulf %24, %26 : vector<16x32xf32>
      %c0_15 = arith.constant 0 : index
      %c0_16 = arith.constant 0 : index
      %28 = vector.load %arg4[%c0_15, %c0_16] : memref<1x32xf32, #tpu.memory_space<vmem>>, vector<1x32xf32>
      %29 = vector.broadcast %28 : vector<1x32xf32> to vector<16x32xf32>
      %30 = arith.addf %27, %29 : vector<16x32xf32>
      %31 = arith.truncf %30 : vector<16x32xf32> to vector<16x32xbf16>
      %c0_17 = arith.constant 0 : index
      %c0_18 = arith.constant 0 : index
      %32 = vector.load %arg7[%c0_17, %c0_18] : memref<16x32xbf16, #tpu.memory_space<vmem>>, vector<16x32xbf16>
      tpu.vector_store %arg7[%c0_17, %c0_18], %31 {strides = array<i32>} : memref<16x32xbf16, #tpu.memory_space<vmem>>, vector<16x32xbf16>,
    } else {
    }
    %c0 = arith.constant 0 : index
    %c0_1 = arith.constant 0 : index
    %3 = vector.load %arg7[%c0, %c0_1] : memref<16x32xbf16, #tpu.memory_space<vmem>>, vector<16x32xbf16>
    %c0_2 = arith.constant 0 : index
    %c0_3 = arith.constant 0 : index
    %4 = vector.load %arg5[%c0_2, %c0_3] : memref<32x32xbf16, #tpu.memory_space<vmem>>, vector<32x32xbf16>
    %cst = arith.constant dense<0.000000e+00> : vector<16x32xf32>
    %5 = tpu.matmul %3, %4, %cst {dimension_numbers = #tpu.dot_dimension_numbers<[1], [0], [0], [1], [0, 0, 1, 1], [], []>} : vector<16x32xbf16>, vector<32x32xbf16>, vector<16x32xf32> -> vector<16x32xf32>
    %c0_4 = arith.constant 0 : index
    %c0_5 = arith.constant 0 : index
    %6 = vector.load %arg6[%c0_4, %c0_5] : memref<16x32xf32, #tpu.memory_space<vmem>>, vector<16x32xf32>
    tpu.vector_store %arg6[%c0_4, %c0_5], %5 {strides = array<i32>} : memref<16x32xf32, #tpu.memory_space<vmem>>, vector<16x32xf32>,
    return
  }
  func.func @transform_0(%arg0: i32, %arg1: i32) -> (i32, i32) {
    %c0_i32 = arith.constant 0 : i32
    %c0_i32_0 = arith.constant 0 : i32
    return %arg0, %c0_i32 : i32, i32
  }
  func.func @transform_1(%arg0: i32, %arg1: i32) -> (i32, i32) {
    %c0_i32 = arith.constant 0 : i32
    %c0_i32_0 = arith.constant 0 : i32
    %c0_i32_1 = arith.constant 0 : i32
    return %c0_i32, %c0_i32_0 : i32, i32
  }
  func.func @transform_2(%arg0: i32, %arg1: i32) -> (i32, i32) {
    %c0_i32 = arith.constant 0 : i32
    %c0_i32_0 = arith.constant 0 : i32
    %c0_i32_1 = arith.constant 0 : i32
    return %c0_i32, %c0_i32_0 : i32, i32
  }
  func.func @transform_3(%arg0: i32, %arg1: i32) -> (i32, i32) {
    %c0_i32 = arith.constant 0 : i32
    %c0_i32_0 = arith.constant 0 : i32
    return %c0_i32, %arg1 : i32, i32
  }
  func.func @transform_4(%arg0: i32, %arg1: i32) -> (i32, i32) {
    %c0_i32 = arith.constant 0 : i32
    return %arg0, %arg1 : i32, i32
  }
}

module attributes {stable_mosaic.version = 11 : i64} {
  func.func @_ffn_kernel(%arg0: i32, %arg1: i32, %arg2: memref<16x32xbf16, #tpu.memory_space<vmem>>, %arg3: memref<1x32xf32, #tpu.memory_space<vmem>>, %arg4: memref<1x32xf32, #tpu.memory_space<vmem>>, %arg5: memref<32x64xbf16, #tpu.memory_space<vmem>>, %arg6: memref<1x64xf32, #tpu.memory_space<vmem>>, %arg7: memref<64x32xbf16, #tpu.memory_space<vmem>>, %arg8: memref<1x32xf32, #tpu.memory_space<vmem>>, %arg9: memref<16x32xbf16, #tpu.memory_space<vmem>>, %arg10: memref<16x32xf32, #tpu.memory_space<vmem>>, %arg11: memref<16x32xbf16, #tpu.memory_space<vmem>>) attributes {dimension_semantics = [#tpu.dimension_semantics<parallel>, #tpu.dimension_semantics<arbitrary>], iteration_bounds = array<i64: 1, 1>, scalar_prefetch = 0 : i64, scratch_operands = 2 : i64, tpu.core_type = #tpu.core_type<tc>, window_params = [{transform_indices = @transform_0, window_bounds = array<i64: 16, 32>}, {pipeline_mode = #tpu.pipeline_mode<synchronous>, transform_indices = @transform_1, window_bounds = array<i64: 1, 32>}, {pipeline_mode = #tpu.pipeline_mode<synchronous>, transform_indices = @transform_2, window_bounds = array<i64: 1, 32>}, {transform_indices = @transform_3, window_bounds = array<i64: 32, 64>}, {transform_indices = @transform_4, window_bounds = array<i64: 1, 64>}, {transform_indices = @transform_5, window_bounds = array<i64: 64, 32>}, {pipeline_mode = #tpu.pipeline_mode<synchronous>, transform_indices = @transform_6, window_bounds = array<i64: 1, 32>}, {transform_indices = @transform_7, window_bounds = array<i64: 16, 32>}]} {
    %c0_i32 = arith.constant 0 : i32
    %0 = arith.cmpi eq, %arg1, %c0_i32 : i32
    %1 = arith.extui %0 : i1 to i32
    %c0_i32_0 = arith.constant 0 : i32
    %2 = arith.cmpi ne, %1, %c0_i32_0 : i32
    scf.if %2 {
      %c0_19 = arith.constant 0 : index
      %c0_20 = arith.constant 0 : index
      %31 = vector.load %arg2[%c0_19, %c0_20] : memref<16x32xbf16, #tpu.memory_space<vmem>>, vector<16x32xbf16>
      %32 = arith.extf %31 : vector<16x32xbf16> to vector<16x32xf32>
      %cst_21 = arith.constant dense<0.000000e+00> : vector<16xf32>
      %33 = vector.multi_reduction <add>, %32, %cst_21 [1] : vector<16x32xf32> to vector<16xf32>
      %34 = vector.shape_cast %33 : vector<16xf32> to vector<16x1xf32>
      %cst_22 = arith.constant 3.200000e+01 : f32
      %35 = vector.broadcast %cst_22 : f32 to vector<16x1xf32>
      %36 = arith.divf %34, %35 : vector<16x1xf32>
      %37 = vector.broadcast %36 : vector<16x1xf32> to vector<16x32xf32>
      %38 = arith.subf %32, %37 : vector<16x32xf32>
      %39 = arith.mulf %38, %38 : vector<16x32xf32>
      %cst_23 = arith.constant dense<0.000000e+00> : vector<16xf32>
      %40 = vector.multi_reduction <add>, %39, %cst_23 [1] : vector<16x32xf32> to vector<16xf32>
      %41 = vector.shape_cast %40 : vector<16xf32> to vector<16x1xf32>
      %cst_24 = arith.constant 3.200000e+01 : f32
      %42 = vector.broadcast %cst_24 : f32 to vector<16x1xf32>
      %43 = arith.divf %41, %42 : vector<16x1xf32>
      %cst_25 = arith.constant 9.99999974E-6 : f32
      %44 = vector.broadcast %cst_25 : f32 to vector<16x1xf32>
      %45 = arith.addf %43, %44 : vector<16x1xf32>
      %46 = math.rsqrt %45 : vector<16x1xf32>
      %47 = vector.broadcast %46 : vector<16x1xf32> to vector<16x32xf32>
      %48 = arith.mulf %38, %47 : vector<16x32xf32>
      %c0_26 = arith.constant 0 : index
      %c0_27 = arith.constant 0 : index
      %49 = vector.load %arg3[%c0_26, %c0_27] : memref<1x32xf32, #tpu.memory_space<vmem>>, vector<1x32xf32>
      %50 = vector.broadcast %49 : vector<1x32xf32> to vector<16x32xf32>
      %51 = arith.mulf %48, %50 : vector<16x32xf32>
      %c0_28 = arith.constant 0 : index
      %c0_29 = arith.constant 0 : index
      %52 = vector.load %arg4[%c0_28, %c0_29] : memref<1x32xf32, #tpu.memory_space<vmem>>, vector<1x32xf32>
      %53 = vector.broadcast %52 : vector<1x32xf32> to vector<16x32xf32>
      %54 = arith.addf %51, %53 : vector<16x32xf32>
      %55 = arith.truncf %54 : vector<16x32xf32> to vector<16x32xbf16>
      %c0_30 = arith.constant 0 : index
      %c0_31 = arith.constant 0 : index
      %56 = vector.load %arg11[%c0_30, %c0_31] : memref<16x32xbf16, #tpu.memory_space<vmem>>, vector<16x32xbf16>
      tpu.vector_store %arg11[%c0_30, %c0_31], %55 {strides = array<i32>} : memref<16x32xbf16, #tpu.memory_space<vmem>>, vector<16x32xbf16>,
      %c0_32 = arith.constant 0 : index
      %c0_33 = arith.constant 0 : index
      %57 = vector.load %arg10[%c0_32, %c0_33] : memref<16x32xf32, #tpu.memory_space<vmem>>, vector<16x32xf32>
      tpu.vector_store %arg10[%c0_32, %c0_33], %32 {strides = array<i32>} : memref<16x32xf32, #tpu.memory_space<vmem>>, vector<16x32xf32>,
    } else {
    }
    %c0 = arith.constant 0 : index
    %c0_1 = arith.constant 0 : index
    %3 = vector.load %arg11[%c0, %c0_1] : memref<16x32xbf16, #tpu.memory_space<vmem>>, vector<16x32xbf16>
    %c0_2 = arith.constant 0 : index
    %c0_3 = arith.constant 0 : index
    %4 = vector.load %arg5[%c0_2, %c0_3] : memref<32x64xbf16, #tpu.memory_space<vmem>>, vector<32x64xbf16>
    %cst = arith.constant dense<0.000000e+00> : vector<16x64xf32>
    %5 = tpu.matmul %3, %4, %cst {dimension_numbers = #tpu.dot_dimension_numbers<[1], [0], [0], [1], [0, 0, 1, 1], [], []>} : vector<16x32xbf16>, vector<32x64xbf16>, vector<16x64xf32> -> vector<16x64xf32>
    %c0_4 = arith.constant 0 : index
    %c0_5 = arith.constant 0 : index
    %6 = vector.load %arg6[%c0_4, %c0_5] : memref<1x64xf32, #tpu.memory_space<vmem>>, vector<1x64xf32>
    %7 = vector.broadcast %6 : vector<1x64xf32> to vector<16x64xf32>
    %8 = arith.addf %5, %7 : vector<16x64xf32>
    %9 = arith.mulf %8, %8 : vector<16x64xf32>
    %10 = arith.mulf %8, %9 : vector<16x64xf32>
    %cst_6 = arith.constant 4.471500e-02 : f32
    %11 = vector.broadcast %cst_6 : f32 to vector<16x64xf32>
    %12 = arith.mulf %11, %10 : vector<16x64xf32>
    %13 = arith.addf %8, %12 : vector<16x64xf32>
    %cst_7 = arith.constant 0.797884583 : f32
    %14 = vector.broadcast %cst_7 : f32 to vector<16x64xf32>
    %15 = arith.mulf %14, %13 : vector<16x64xf32>
    %16 = math.tanh %15 : vector<16x64xf32>
    %cst_8 = arith.constant 1.000000e+00 : f32
    %17 = vector.broadcast %cst_8 : f32 to vector<16x64xf32>
    %18 = arith.addf %17, %16 : vector<16x64xf32>
    %cst_9 = arith.constant 5.000000e-01 : f32
    %19 = vector.broadcast %cst_9 : f32 to vector<16x64xf32>
    %20 = arith.mulf %19, %18 : vector<16x64xf32>
    %21 = arith.mulf %8, %20 : vector<16x64xf32>
    %c0_10 = arith.constant 0 : index
    %c0_11 = arith.constant 0 : index
    %22 = vector.load %arg10[%c0_10, %c0_11] : memref<16x32xf32, #tpu.memory_space<vmem>>, vector<16x32xf32>
    %23 = arith.truncf %21 : vector<16x64xf32> to vector<16x64xbf16>
    %c0_12 = arith.constant 0 : index
    %c0_13 = arith.constant 0 : index
    %24 = vector.load %arg7[%c0_12, %c0_13] : memref<64x32xbf16, #tpu.memory_space<vmem>>, vector<64x32xbf16>
    %cst_14 = arith.constant dense<0.000000e+00> : vector<16x32xf32>
    %25 = tpu.matmul %23, %24, %cst_14 {dimension_numbers = #tpu.dot_dimension_numbers<[1], [0], [0], [1], [0, 0, 1, 1], [], []>} : vector<16x64xbf16>, vector<64x32xbf16>, vector<16x32xf32> -> vector<16x32xf32>
    %26 = arith.addf %22, %25 : vector<16x32xf32>
    %c0_15 = arith.constant 0 : index
    %c0_16 = arith.constant 0 : index
    %27 = vector.load %arg10[%c0_15, %c0_16] : memref<16x32xf32, #tpu.memory_space<vmem>>, vector<16x32xf32>
    tpu.vector_store %arg10[%c0_15, %c0_16], %26 {strides = array<i32>} : memref<16x32xf32, #tpu.memory_space<vmem>>, vector<16x32xf32>,
    %c0_i32_17 = arith.constant 0 : i32
    %28 = arith.cmpi eq, %arg1, %c0_i32_17 : i32
    %29 = arith.extui %28 : i1 to i32
    %c0_i32_18 = arith.constant 0 : i32
    %30 = arith.cmpi ne, %29, %c0_i32_18 : i32
    scf.if %30 {
      %c0_19 = arith.constant 0 : index
      %c0_20 = arith.constant 0 : index
      %31 = vector.load %arg10[%c0_19, %c0_20] : memref<16x32xf32, #tpu.memory_space<vmem>>, vector<16x32xf32>
      %c0_21 = arith.constant 0 : index
      %c0_22 = arith.constant 0 : index
      %32 = vector.load %arg8[%c0_21, %c0_22] : memref<1x32xf32, #tpu.memory_space<vmem>>, vector<1x32xf32>
      %33 = vector.broadcast %32 : vector<1x32xf32> to vector<16x32xf32>
      %34 = arith.addf %31, %33 : vector<16x32xf32>
      %35 = arith.truncf %34 : vector<16x32xf32> to vector<16x32xbf16>
      %c0_23 = arith.constant 0 : index
      %c0_24 = arith.constant 0 : index
      %36 = vector.load %arg9[%c0_23, %c0_24] : memref<16x32xbf16, #tpu.memory_space<vmem>>, vector<16x32xbf16>
      tpu.vector_store %arg9[%c0_23, %c0_24], %35 {strides = array<i32>} : memref<16x32xbf16, #tpu.memory_space<vmem>>, vector<16x32xbf16>,
    } else {
    }
    return
  }
  func.func @transform_0(%arg0: i32, %arg1: i32) -> (i32, i32) {
    %c0_i32 = arith.constant 0 : i32
    %c0_i32_0 = arith.constant 0 : i32
    return %arg0, %c0_i32 : i32, i32
  }
  func.func @transform_1(%arg0: i32, %arg1: i32) -> (i32, i32) {
    %c0_i32 = arith.constant 0 : i32
    %c0_i32_0 = arith.constant 0 : i32
    %c0_i32_1 = arith.constant 0 : i32
    return %c0_i32, %c0_i32_0 : i32, i32
  }
  func.func @transform_2(%arg0: i32, %arg1: i32) -> (i32, i32) {
    %c0_i32 = arith.constant 0 : i32
    %c0_i32_0 = arith.constant 0 : i32
    %c0_i32_1 = arith.constant 0 : i32
    return %c0_i32, %c0_i32_0 : i32, i32
  }
  func.func @transform_3(%arg0: i32, %arg1: i32) -> (i32, i32) {
    %c0_i32 = arith.constant 0 : i32
    %c0_i32_0 = arith.constant 0 : i32
    return %c0_i32, %arg1 : i32, i32
  }
  func.func @transform_4(%arg0: i32, %arg1: i32) -> (i32, i32) {
    %c0_i32 = arith.constant 0 : i32
    %c0_i32_0 = arith.constant 0 : i32
    return %c0_i32, %arg1 : i32, i32
  }
  func.func @transform_5(%arg0: i32, %arg1: i32) -> (i32, i32) {
    %c0_i32 = arith.constant 0 : i32
    %c0_i32_0 = arith.constant 0 : i32
    return %arg1, %c0_i32 : i32, i32
  }
  func.func @transform_6(%arg0: i32, %arg1: i32) -> (i32, i32) {
    %c0_i32 = arith.constant 0 : i32
    %c0_i32_0 = arith.constant 0 : i32
    %c0_i32_1 = arith.constant 0 : i32
    return %c0_i32, %c0_i32_0 : i32, i32
  }
  func.func @transform_7(%arg0: i32, %arg1: i32) -> (i32, i32) {
    %c0_i32 = arith.constant 0 : i32
    %c0_i32_0 = arith.constant 0 : i32
    return %arg0, %c0_i32 : i32, i32
  }
}

</mosaic_0001>

<llo_original>
// kernel: _lambda_.13
$region0: #{_lambda_.13}
  #allocation0 [shape = 'u32[]', space=smem, size = 0x4, offset = 0x4, fixed_abs, tag = 'smem constant byte address 0x4 - core index']
  #allocation1 [shape = 'u32[144,128]{1,0:T(1,128)}', space=vmem, size = 0x12000, scoped, tag = 'internal scratch']
  #allocation2 [shape = 'bf16[16,32]{1,0:T(16,128)(2,1)}', space=vmem, size = 0x1000, scoped, tag = 'scratch operand']
  %s0 = inlined_call_operand.vmem [shape: bf16[16,32], index: 0, kind: input, shape index: {}]
  %s1 = inlined_call_operand.vmem [shape: f32[1,32], index: 1, kind: input, shape index: {}]
  %s2 = inlined_call_operand.vmem [shape: f32[1,32], index: 2, kind: input, shape index: {}]
  %s3 = inlined_call_operand.vmem [shape: bf16[32,32], index: 3, kind: input, shape index: {}]
  %s4 = inlined_call_operand.hbm [shape: f32[16,32], index: 4, kind: output, shape index: {}]
  %s5 = sld [smem:[#allocation0]]
  $region30: #{_lambda_.13} parent=0
    _
  %s7 = ssub.s32 1, %s5
  %s8 = scalar_select 0, %s7, %s5
  $region1: #{_lambda_.13} parent=0
    #allocation3 [shape = 'u8[8192]{0}', space=vmem, size = 0x2000, scoped, tag = 'output window, operand 0, single buffered']
    #allocation4 [shape = 's32[1]{0}', space=sflag, size = 0x4, scoped, tag = 'scoped memory for _lambda_.13']
    %9 = vsyncpa [#allocation4], 0
    // Predicated region
    $region2: #{_lambda_.13} parent=1 // pred_check
      _
    $region3: #{_lambda_.13} parent=1 // pred_check_branch
      %11 = sbr.rel (0) target = $region5
    $region4: #{_lambda_.13} parent=1 // pred_region
      _
    $region5: #{_lambda_.13} parent=1 // pred_fallthru
      _
    // Predicated region
    $region6: #{_lambda_.13} parent=1 // pred_check
      _
    $region7: #{_lambda_.13} parent=1 // pred_check_branch
      %13 = sbr.rel (0) target = $region9
    $region8: #{_lambda_.13} parent=1 // pred_region
      _
    $region9: #{_lambda_.13} parent=1 // pred_fallthru
      _
    // Predicated region
    $region10: #{_lambda_.13} parent=1 // pred_check
      _
    $region11: #{_lambda_.13} parent=1 // pred_check_branch
      %15 = sbr.rel (0) target = $region13
    $region12: #{_lambda_.13} parent=1 // pred_region
      _
    $region13: #{_lambda_.13} parent=1 // pred_fallthru
      _
    // Predicated region
    $region14: #{_lambda_.13} parent=1 // pred_check
      _
    $region15: #{_lambda_.13} parent=1 // pred_check_branch
      %17 = sbr.rel (0) target = $region17
    $region16: #{_lambda_.13} parent=1 // pred_region
      _
    $region17: #{_lambda_.13} parent=1 // pred_fallthru
      _
    %p19 = scmp.eq.s32.totalorder 0, 0
    // Predicated region
    $region18: #{_lambda_.13} parent=1 // pred_check
      %p20 = pneg %p19
    $region19: #{_lambda_.13} parent=1 // pred_check_branch
      %22 = sbr.rel (%p20) target = $region21
    $region20: #{_lambda_.13} parent=1 // pred_region
      %v23 = vld [vmem:[%s0] sm:$0xf]
      %v24 = vld [vmem:[%s0 + $0x4] sm:$0xf]
      %v25 = vunpack.c.l.bf16 %v23
      %v26 = vunpack.c.l.bf16 %v24
      %vm27 = vcmask 261120
      %v28 = vsel %vm27, %v25, 0.0
      %29 = vadd.xlane.f32.xlu0 %v28
      %v30 = vpop.xlane.xlu0 %29
      %v31 = vsel %vm27, %v26, 0.0
      %32 = vadd.xlane.f32.xlu0 %v31
      %v33 = vpop.xlane.xlu0 %32
      %v34 = vrcp.pop 32.0
      %v35 = vmul.f32 %v30, %v34
      %v36 = vmul.f32 %v33, %v34
      %v37 = vsub.f32 %v25, %v35
      %v38 = vsub.f32 %v26, %v36
      %v39 = vmul.f32 %v37, %v37
      %v40 = vmul.f32 %v38, %v38
      %v41 = vsel %vm27, %v39, 0.0
      %42 = vadd.xlane.f32.xlu0 %v41
      %v43 = vpop.xlane.xlu0 %42
      %v44 = vsel %vm27, %v40, 0.0
      %45 = vadd.xlane.f32.xlu0 %v44
      %v46 = vpop.xlane.xlu0 %45
      %v47 = vmul.f32 %v43, %v34
      %v48 = vmul.f32 %v46, %v34
      %v49 = vadd.f32 %v47, 1e-05
      %v50 = vadd.f32 %v48, 1e-05
      %v51 = vrsqrt.pop %v49
      %v52 = vrsqrt.pop %v50
      %v53 = vmul.f32 %v37, %v51
      %v54 = vmul.f32 %v38, %v52
      %v55 = vld [vmem:[%s1] sm:$0x1]
      %v57 = vlaneseq
      %v58 = vshrl.u32 %v57, 7
      %v59 = vsub.s32 0, %v58
      %v60 = vrot.slane %v55, %v59
      %v62 = vmul.f32 %v53, %v60
      %v63 = vmul.f32 %v54, %v60
      %v64 = vld [vmem:[%s2] sm:$0x1]
      %v66 = vlaneseq
      %v67 = vshrl.u32 %v66, 7
      %v68 = vsub.s32 0, %v67
      %v69 = vrot.slane %v64, %v68
      %v71 = vadd.f32 %v62, %v69
      %v72 = vadd.f32 %v63, %v69
      %v73 = vpack.c.bf16 %v72, %v71
      %74 = vst.msk [vmem:[#allocation2] sm:$0xff] %vm27, %v73
    $region21: #{_lambda_.13} parent=1 // pred_fallthru
      _
    %v75 = vld [vmem:[#allocation2] sm:$0xff]
    %v76 = vld [vmem:[%s3] sm:$0xf]
    %v77 = vld [vmem:[%s3 + $0x4] sm:$0xf]
    %v78 = vld [vmem:[%s3 + $0x8] sm:$0xf]
    %v79 = vld [vmem:[%s3 + $0xc] sm:$0xf]
    %v84 = vunpack.c.l.b16 %v76
    %v85 = vunpack.c.l.b16 %v77
    %v86 = vunpack.c.l.b16 %v78
    %v87 = vunpack.c.l.b16 %v79
    %v88 = vpack.c.b16 %v85, %v84
    %v89 = vpack.c.b16 %v87, %v86
    %vm92 = vcmask 261120
    %v94 = vsel %vm92, %v75, 0
    %96 = vmatprep.subr.bf16.mxu0 0
    %97 = vmatpush1.bf16.msra.mxu0 %v88
    %98 = vmatprep.subr.bf16.mxu0 0
    %99 = vmatpush1.bf16.msra.mxu0 %v89
    %100 = vmatprep.subr.bf16.mxu0 0
    %101 = vmatpush1.bf16.msra.mxu0 0
    %102 = vmatprep.subr.bf16.mxu0 0
    %103 = vmatpush1.bf16.msra.mxu0 0
    %104 = vmatprep.subr.bf16.mxu0 0
    %105 = vmatpush1.bf16.msra.mxu0 0
    %106 = vmatprep.subr.bf16.mxu0 0
    %107 = vmatpush1.bf16.msra.mxu0 0
    %108 = vmatprep.subr.bf16.mxu0 0
    %109 = vmatpush1.bf16.msra.mxu0 0
    %110 = vmatprep.subr.bf16.mxu0 0
    %111 = vmatpush1.bf16.msra.mxu0 0
    %112 = vmatprep.subr.bf16.mxu0 0
    %113 = vmatpush1.bf16.msra.mxu0 0
    %114 = vmatprep.subr.bf16.mxu0 0
    %115 = vmatpush1.bf16.msra.mxu0 0
    %116 = vmatprep.subr.bf16.mxu0 0
    %117 = vmatpush1.bf16.msra.mxu0 0
    %118 = vmatprep.subr.bf16.mxu0 0
    %119 = vmatpush1.bf16.msra.mxu0 0
    %120 = vmatprep.subr.bf16.mxu0 0
    %121 = vmatpush1.bf16.msra.mxu0 0
    %122 = vmatprep.subr.bf16.mxu0 0
    %123 = vmatpush1.bf16.msra.mxu0 0
    %124 = vmatprep.subr.bf16.mxu0 0
    %125 = vmatpush1.bf16.msra.mxu0 0
    %126 = vmatprep.subr.bf16.mxu0 0
    %127 = vmatpush1.bf16.msra.mxu0 0
    %128 = vmatprep.mubr.bf16.mxu0 0
    %129 = vmatmul.mubr.bf16.gmra.mrb[0].mxu0 %v94
    %v130 = vpop.f32.mrb[0].mxu0
    %v131 = vadd.f32 0.0, %v130
    %v132 = vpop.f32.mrb[0].mxu0
    %v133 = vpop.f32.mrb[0].mxu0
    %v134 = vadd.f32 0.0, %v133
    %v135 = vpop.f32.mrb[0].mxu0
    %136 = vdwg.mxu0
    %137 = vst.msk [vmem:[#allocation3] sm:$0xff] %vm92, %v131
    %138 = vst.msk [vmem:[#allocation3 + $0x8] sm:$0xff] %vm92, %v134
    // Predicated region
    $region22: #{_lambda_.13} parent=1 // pred_check
      _
    $region23: #{_lambda_.13} parent=1 // pred_check_branch
      %140 = sbr.rel (0) target = $region25
    $region24: #{_lambda_.13} parent=1 // pred_region
      %s142 = ssub.s32 256, 256
      %143 = vsyncadd [#allocation4], %s142
      %s144 = sshll.u32 [#allocation3], 4
      %s145 = int_to_ptr.vmem [resolvable:$true] %s144
      %150 = dma.vmem_to_hbm [thread:$0]  %s145, 256, %s4, [#allocation4], 128, 128, 8
    $region25: #{_lambda_.13} parent=1 // pred_fallthru
      _
    // Predicated region
    $region26: #{_lambda_.13} parent=1 // pred_check
      _
    $region27: #{_lambda_.13} parent=1 // pred_check_branch
      %152 = sbr.rel (0) target = $region29
    $region28: #{_lambda_.13} parent=1 // pred_region
      %153 = dma.done [#allocation4], 256
    $region29: #{_lambda_.13} parent=1 // pred_fallthru
      _
    %154 = vsyncpa [#allocation4], 1

// kernel: _lambda_.7
$region0: #{_lambda_.7}
  #allocation0 [shape = 'u32[]', space=smem, size = 0x4, offset = 0x4, fixed_abs, tag = 'smem constant byte address 0x4 - core index']
  #allocation1 [shape = 'u32[144,128]{1,0:T(1,128)}', space=vmem, size = 0x12000, scoped, tag = 'internal scratch']
  #allocation2 [shape = 'bf16[16,32]{1,0:T(16,128)(2,1)}', space=vmem, size = 0x1000, scoped, tag = 'scratch operand']
  %s0 = inlined_call_operand.vmem [shape: bf16[16,32], index: 0, kind: input, shape index: {}]
  %s1 = inlined_call_operand.vmem [shape: f32[1,32], index: 1, kind: input, shape index: {}]
  %s2 = inlined_call_operand.vmem [shape: f32[1,32], index: 2, kind: input, shape index: {}]
  %s3 = inlined_call_operand.vmem [shape: bf16[32,128], index: 3, kind: input, shape index: {}]
  %s4 = inlined_call_operand.vmem [shape: bf16[16,128], index: 4, kind: output, shape index: {}]
  %s5 = sld [smem:[#allocation0]]
  $region30: #{_lambda_.7} parent=0
    _
  %s7 = ssub.s32 1, %s5
  %s8 = scalar_select 0, %s7, %s5
  // Predicated region
  $region2: #{_lambda_.7} parent=0 // pred_check
    _
  $region3: #{_lambda_.7} parent=0 // pred_check_branch
    %10 = sbr.rel (0) target = $region5
  $region4: #{_lambda_.7} parent=0 // pred_region
    _
  $region5: #{_lambda_.7} parent=0 // pred_fallthru
    _
  // Predicated region
  $region6: #{_lambda_.7} parent=0 // pred_check
    _
  $region7: #{_lambda_.7} parent=0 // pred_check_branch
    %12 = sbr.rel (0) target = $region9
  $region8: #{_lambda_.7} parent=0 // pred_region
    _
  $region9: #{_lambda_.7} parent=0 // pred_fallthru
    _
  // Predicated region
  $region10: #{_lambda_.7} parent=0 // pred_check
    _
  $region11: #{_lambda_.7} parent=0 // pred_check_branch
    %14 = sbr.rel (0) target = $region13
  $region12: #{_lambda_.7} parent=0 // pred_region
    _
  $region13: #{_lambda_.7} parent=0 // pred_fallthru
    _
  // Predicated region
  $region14: #{_lambda_.7} parent=0 // pred_check
    _
  $region15: #{_lambda_.7} parent=0 // pred_check_branch
    %16 = sbr.rel (0) target = $region17
  $region16: #{_lambda_.7} parent=0 // pred_region
    _
  $region17: #{_lambda_.7} parent=0 // pred_fallthru
    _
  %p18 = scmp.eq.s32.totalorder 0, 0
  // Predicated region
  $region18: #{_lambda_.7} parent=0 // pred_check
    %p19 = pneg %p18
  $region19: #{_lambda_.7} parent=0 // pred_check_branch
    %21 = sbr.rel (%p19) target = $region21
  $region20: #{_lambda_.7} parent=0 // pred_region
    %v22 = vld [vmem:[%s0] sm:$0xf]
    %v23 = vld [vmem:[%s0 + $0x4] sm:$0xf]
    %v24 = vunpack.c.l.bf16 %v22
    %v25 = vunpack.c.l.bf16 %v23
    %vm26 = vcmask 261120
    %v27 = vsel %vm26, %v24, 0.0
    %28 = vadd.xlane.f32.xlu0 %v27
    %v29 = vpop.xlane.xlu0 %28
    %v30 = vsel %vm26, %v25, 0.0
    %31 = vadd.xlane.f32.xlu0 %v30
    %v32 = vpop.xlane.xlu0 %31
    %v33 = vrcp.pop 32.0
    %v34 = vmul.f32 %v29, %v33
    %v35 = vmul.f32 %v32, %v33
    %v36 = vsub.f32 %v24, %v34
    %v37 = vsub.f32 %v25, %v35
    %v38 = vmul.f32 %v36, %v36
    %v39 = vmul.f32 %v37, %v37
    %v40 = vsel %vm26, %v38, 0.0
    %41 = vadd.xlane.f32.xlu0 %v40
    %v42 = vpop.xlane.xlu0 %41
    %v43 = vsel %vm26, %v39, 0.0
    %44 = vadd.xlane.f32.xlu0 %v43
    %v45 = vpop.xlane.xlu0 %44
    %v46 = vmul.f32 %v42, %v33
    %v47 = vmul.f32 %v45, %v33
    %v48 = vadd.f32 %v46, 1e-05
    %v49 = vadd.f32 %v47, 1e-05
    %v50 = vrsqrt.pop %v48
    %v51 = vrsqrt.pop %v49
    %v52 = vmul.f32 %v36, %v50
    %v53 = vmul.f32 %v37, %v51
    %v54 = vld [vmem:[%s1] sm:$0x1]
    %v56 = vlaneseq
    %v57 = vshrl.u32 %v56, 7
    %v58 = vsub.s32 0, %v57
    %v59 = vrot.slane %v54, %v58
    %v61 = vmul.f32 %v52, %v59
    %v62 = vmul.f32 %v53, %v59
    %v63 = vld [vmem:[%s2] sm:$0x1]
    %v65 = vlaneseq
    %v66 = vshrl.u32 %v65, 7
    %v67 = vsub.s32 0, %v66
    %v68 = vrot.slane %v63, %v67
    %v70 = vadd.f32 %v61, %v68
    %v71 = vadd.f32 %v62, %v68
    %v72 = vpack.c.bf16 %v71, %v70
    %73 = vst.msk [vmem:[#allocation2] sm:$0xff] %vm26, %v72
  $region21: #{_lambda_.7} parent=0 // pred_fallthru
    _
  %v74 = vld [vmem:[#allocation2] sm:$0xff]
  %v75 = vld [vmem:[%s3] sm:$0xf]
  %v76 = vld [vmem:[%s3 + $0x4] sm:$0xf]
  %v77 = vld [vmem:[%s3 + $0x8] sm:$0xf]
  %v78 = vld [vmem:[%s3 + $0xc] sm:$0xf]
  %v83 = vunpack.c.l.b16 %v75
  %v84 = vunpack.c.l.b16 %v76
  %v85 = vunpack.c.l.b16 %v77
  %v86 = vunpack.c.l.b16 %v78
  %v87 = vpack.c.b16 %v84, %v83
  %v88 = vpack.c.b16 %v86, %v85
  %vm91 = vcmask 261120
  %v93 = vsel %vm91, %v74, 0
  %95 = vmatprep.subr.bf16.mxu0 0
  %96 = vmatpush1.bf16.msra.mxu0 %v87
  %97 = vmatprep.subr.bf16.mxu0 0
  %98 = vmatpush1.bf16.msra.mxu0 %v88
  %99 = vmatprep.subr.bf16.mxu0 0
  %100 = vmatpush1.bf16.msra.mxu0 0
  %101 = vmatprep.subr.bf16.mxu0 0
  %102 = vmatpush1.bf16.msra.mxu0 0
  %103 = vmatprep.subr.bf16.mxu0 0
  %104 = vmatpush1.bf16.msra.mxu0 0
  %105 = vmatprep.subr.bf16.mxu0 0
  %106 = vmatpush1.bf16.msra.mxu0 0
  %107 = vmatprep.subr.bf16.mxu0 0
  %108 = vmatpush1.bf16.msra.mxu0 0
  %109 = vmatprep.subr.bf16.mxu0 0
  %110 = vmatpush1.bf16.msra.mxu0 0
  %111 = vmatprep.subr.bf16.mxu0 0
  %112 = vmatpush1.bf16.msra.mxu0 0
  %113 = vmatprep.subr.bf16.mxu0 0
  %114 = vmatpush1.bf16.msra.mxu0 0
  %115 = vmatprep.subr.bf16.mxu0 0
  %116 = vmatpush1.bf16.msra.mxu0 0
  %117 = vmatprep.subr.bf16.mxu0 0
  %118 = vmatpush1.bf16.msra.mxu0 0
  %119 = vmatprep.subr.bf16.mxu0 0
  %120 = vmatpush1.bf16.msra.mxu0 0
  %121 = vmatprep.subr.bf16.mxu0 0
  %122 = vmatpush1.bf16.msra.mxu0 0
  %123 = vmatprep.subr.bf16.mxu0 0
  %124 = vmatpush1.bf16.msra.mxu0 0
  %125 = vmatprep.subr.bf16.mxu0 0
  %126 = vmatpush1.bf16.msra.mxu0 0
  %127 = vmatprep.mubr.bf16.mxu0 0
  %128 = vmatmul.mubr.bf16.gmra.mrb[0].mxu0 %v93
  %v129 = vpop.f32.mrb[0].mxu0
  %v130 = vadd.f32 0.0, %v129
  %v131 = vpop.f32.mrb[0].mxu0
  %v132 = vpop.f32.mrb[0].mxu0
  %v133 = vadd.f32 0.0, %v132
  %v134 = vpop.f32.mrb[0].mxu0
  %135 = vdwg.mxu0
  %v136 = vpack.c.bf16 %v133, %v130
  %v138 = vunpack.c.l.b16 %v136
  %v139 = vunpack.c.h.b16 %v136
  %v140 = vpack.c.b16 %v138, %v138
  %v141 = vpack.c.b16 %v139, %v139
  %144 = vst [vmem:[%s4] sm:$0xf] %v140
  %145 = vst [vmem:[%s4 + $0x4] sm:$0xf] %v141
  // Predicated region
  $region22: #{_lambda_.7} parent=0 // pred_check
    _
  $region23: #{_lambda_.7} parent=0 // pred_check_branch
    %147 = sbr.rel (0) target = $region25
  $region24: #{_lambda_.7} parent=0 // pred_region
    _
  $region25: #{_lambda_.7} parent=0 // pred_fallthru
    _
  // Predicated region
  $region26: #{_lambda_.7} parent=0 // pred_check
    _
  $region27: #{_lambda_.7} parent=0 // pred_check_branch
    %149 = sbr.rel (0) target = $region29
  $region28: #{_lambda_.7} parent=0 // pred_region
    _
  $region29: #{_lambda_.7} parent=0 // pred_fallthru
    _

// kernel: _lambda_.8
$region0: #{_lambda_.8}
  #allocation0 [shape = 'u32[]', space=smem, size = 0x4, offset = 0x4, fixed_abs, tag = 'smem constant byte address 0x4 - core index']
  #allocation1 [shape = 'u32[144,128]{1,0:T(1,128)}', space=vmem, size = 0x12000, scoped, tag = 'internal scratch']
  #allocation2 [shape = 'f32[8,32]{1,0:T(8,128)}', space=vmem, size = 0x1000, scoped, tag = 'scratch operand']
  %s0 = inlined_call_operand.vmem [shape: bf16[2,8,32], index: 0, kind: input, shape index: {}]
  %s1 = inlined_call_operand.vmem [shape: bf16[2,2,8,16], index: 1, kind: input, shape index: {}]
  %s2 = inlined_call_operand.vmem [shape: bf16[2,2,8,16], index: 2, kind: input, shape index: {}]
  %s3 = inlined_call_operand.vmem [shape: bf16[2,2,8,16], index: 3, kind: input, shape index: {}]
  %s4 = inlined_call_operand.vmem [shape: bf16[2,2,8,16], index: 4, kind: input, shape index: {}]
  %s5 = inlined_call_operand.vmem [shape: bf16[2,16,32], index: 5, kind: input, shape index: {}]
  %s6 = inlined_call_operand.vmem [shape: f32[8,8], index: 6, kind: input, shape index: {}]
  %s7 = inlined_call_operand.vmem [shape: f32[8,8], index: 7, kind: input, shape index: {}]
  %s8 = inlined_call_operand.vmem [shape: bf16[2,8,32], index: 8, kind: output, shape index: {}]
  %s9 = sld [smem:[#allocation0]]
  $region73: #{_lambda_.8} parent=0
    _
  %s11 = ssub.s32 1, %s9
  %s12 = scalar_select 0, %s11, %s9
  loop: start=0, step=1, limit=6
  $region2: #{_lambda_.8} parent=0 // loop_pre_header
    _
  $region3: #{_lambda_.8} parent=0 // loop_header
    %s14 = sphi 0, %s18
    %p15 = scmp.ge.s32.totalorder %s14, 6
    %s21 = sphi 0, %s33
    %s22 = sphi 0, %s29
    %s23 = sphi 0, %s21
    %s24 = sphi 0, %s22
    %s25 = sphi 0, %s23
    %s26 = sphi 0, %s24
    %s36 = sphi 0, %s38
    %s39 = sphi 0, %s36
    %s40 = sphi 0, %s39
    %s56 = sphi 0, %s40
    %s64 = sphi 0, %s66
    %s67 = sphi 0, %s64
    %s68 = sphi 0, %s67
    %s84 = sphi 0, %s68
    %s92 = sphi 0, %s94
    %s95 = sphi 0, %s92
    %s96 = sphi 0, %s95
    %s112 = sphi 0, %s96
    %s120 = sphi 0, %s122
    %s123 = sphi 0, %s120
    %s124 = sphi 0, %s123
    %s140 = sphi 0, %s124
    %s148 = sphi 0, %s150
    %s151 = sphi 0, %s148
    %s152 = sphi 0, %s151
    %s168 = sphi 0, %s152
    %s174 = sphi 0, %s176
    %s177 = sphi 0, %s174
    %s178 = sphi 0, %s177
    %s194 = sphi 0, %s178
    %s198 = sphi 0, %s198
    %s200 = sphi 0, %s198
    %s201 = sphi 0, %s200
    %s215 = sphi 0, %s201
    %s219 = sphi 0, %s219
    %s221 = sphi 0, %s219
    %s222 = sphi 0, %s221
    %s236 = sphi 0, %s222
    %s242 = sphi 0, %s244
    %s245 = sphi 0, %s242
    %s246 = sphi 0, %s245
    %s262 = sphi 0, %s246
  $region4: #{_lambda_.8} parent=0 // loop_header_branch
    %17 = sbr.rel (%p15) target = $region8
  $region5: #{_lambda_.8} parent=0 // loop_body
    %s19 = ssub.s32 %s14, 1
    %s20 = ssub.s32 %s14, 2
    %s27 = sadd.s32 1, %s22
    %p28 = scmp.ge.s32.totalorder %s27, 2
    %s29 = scalar_select %p28, 0, %s27
    %s30 = sadd.s32 1, %s21
    %s31 = scalar_select %p28, %s30, %s21
    %p32 = scmp.ge.s32.totalorder %s31, 2
    %s33 = scalar_select %p32, 0, %s31
    %s34 = ssub.s32 %s21, %s33
    %p35 = scmp.eq.s32.totalorder %s34, 0
    %s37 = sadd.s32 %s36, 1
    %s38 = scalar_select %p35, %s36, %s37
    %p41 = pneg %p35
    %p42 = scmp.eq.s32.totalorder %s14, 3
    %p43 = por %p41, %p42
    %p44 = scmp.ne.s32.totalorder %s36, %s39
    %p45 = scmp.eq.s32.totalorder %s14, 0
    %p46 = por %p44, %p45
    %p47 = scmp.ne.s32.totalorder %s36, %s39
    %p48 = scmp.eq.s32.totalorder %s19, 3
    %p49 = por %p47, %p48
    %p50 = scmp.ne.s32.totalorder %s39, %s40
    %p51 = scmp.eq.s32.totalorder %s19, 0
    %p52 = por %p50, %p51
    %p53 = scmp.ne.s32.totalorder %s39, %s40
    %p54 = scmp.eq.s32.totalorder %s20, 3
    %p55 = por %p53, %p54
    %p57 = scmp.ne.s32.totalorder %s40, %s56
    %p58 = scmp.eq.s32.totalorder %s20, 0
    %p59 = por %p57, %p58
    %s60 = ssub.s32 %s21, %s33
    %s61 = ssub.s32 %s22, %s29
    %s62 = sor.u32 %s60, %s61
    %p63 = scmp.eq.s32.totalorder %s62, 0
    %s65 = sadd.s32 %s64, 1
    %s66 = scalar_select %p63, %s64, %s65
    %p69 = pneg %p63
    %p70 = scmp.eq.s32.totalorder %s14, 3
    %p71 = por %p69, %p70
    %p72 = scmp.ne.s32.totalorder %s64, %s67
    %p73 = scmp.eq.s32.totalorder %s14, 0
    %p74 = por %p72, %p73
    %p75 = scmp.ne.s32.totalorder %s64, %s67
    %p76 = scmp.eq.s32.totalorder %s19, 3
    %p77 = por %p75, %p76
    %p78 = scmp.ne.s32.totalorder %s67, %s68
    %p79 = scmp.eq.s32.totalorder %s19, 0
    %p80 = por %p78, %p79
    %p81 = scmp.ne.s32.totalorder %s67, %s68
    %p82 = scmp.eq.s32.totalorder %s20, 3
    %p83 = por %p81, %p82
    %p85 = scmp.ne.s32.totalorder %s68, %s84
    %p86 = scmp.eq.s32.totalorder %s20, 0
    %p87 = por %p85, %p86
    %s88 = ssub.s32 %s21, %s33
    %s89 = ssub.s32 %s22, %s29
    %s90 = sor.u32 %s88, %s89
    %p91 = scmp.eq.s32.totalorder %s90, 0
    %s93 = sadd.s32 %s92, 1
    %s94 = scalar_select %p91, %s92, %s93
    %p97 = pneg %p91
    %p98 = scmp.eq.s32.totalorder %s14, 3
    %p99 = por %p97, %p98
    %p100 = scmp.ne.s32.totalorder %s92, %s95
    %p101 = scmp.eq.s32.totalorder %s14, 0
    %p102 = por %p100, %p101
    %p103 = scmp.ne.s32.totalorder %s92, %s95
    %p104 = scmp.eq.s32.totalorder %s19, 3
    %p105 = por %p103, %p104
    %p106 = scmp.ne.s32.totalorder %s95, %s96
    %p107 = scmp.eq.s32.totalorder %s19, 0
    %p108 = por %p106, %p107
    %p109 = scmp.ne.s32.totalorder %s95, %s96
    %p110 = scmp.eq.s32.totalorder %s20, 3
    %p111 = por %p109, %p110
    %p113 = scmp.ne.s32.totalorder %s96, %s112
    %p114 = scmp.eq.s32.totalorder %s20, 0
    %p115 = por %p113, %p114
    %s116 = ssub.s32 %s21, %s33
    %s117 = ssub.s32 %s22, %s29
    %s118 = sor.u32 %s116, %s117
    %p119 = scmp.eq.s32.totalorder %s118, 0
    %s121 = sadd.s32 %s120, 1
    %s122 = scalar_select %p119, %s120, %s121
    %p125 = pneg %p119
    %p126 = scmp.eq.s32.totalorder %s14, 3
    %p127 = por %p125, %p126
    %p128 = scmp.ne.s32.totalorder %s120, %s123
    %p129 = scmp.eq.s32.totalorder %s14, 0
    %p130 = por %p128, %p129
    %p131 = scmp.ne.s32.totalorder %s120, %s123
    %p132 = scmp.eq.s32.totalorder %s19, 3
    %p133 = por %p131, %p132
    %p134 = scmp.ne.s32.totalorder %s123, %s124
    %p135 = scmp.eq.s32.totalorder %s19, 0
    %p136 = por %p134, %p135
    %p137 = scmp.ne.s32.totalorder %s123, %s124
    %p138 = scmp.eq.s32.totalorder %s20, 3
    %p139 = por %p137, %p138
    %p141 = scmp.ne.s32.totalorder %s124, %s140
    %p142 = scmp.eq.s32.totalorder %s20, 0
    %p143 = por %p141, %p142
    %s144 = ssub.s32 %s21, %s33
    %s145 = ssub.s32 %s22, %s29
    %s146 = sor.u32 %s144, %s145
    %p147 = scmp.eq.s32.totalorder %s146, 0
    %s149 = sadd.s32 %s148, 1
    %s150 = scalar_select %p147, %s148, %s149
    %p153 = pneg %p147
    %p154 = scmp.eq.s32.totalorder %s14, 3
    %p155 = por %p153, %p154
    %p156 = scmp.ne.s32.totalorder %s148, %s151
    %p157 = scmp.eq.s32.totalorder %s14, 0
    %p158 = por %p156, %p157
    %p159 = scmp.ne.s32.totalorder %s148, %s151
    %p160 = scmp.eq.s32.totalorder %s19, 3
    %p161 = por %p159, %p160
    %p162 = scmp.ne.s32.totalorder %s151, %s152
    %p163 = scmp.eq.s32.totalorder %s19, 0
    %p164 = por %p162, %p163
    %p165 = scmp.ne.s32.totalorder %s151, %s152
    %p166 = scmp.eq.s32.totalorder %s20, 3
    %p167 = por %p165, %p166
    %p169 = scmp.ne.s32.totalorder %s152, %s168
    %p170 = scmp.eq.s32.totalorder %s20, 0
    %p171 = por %p169, %p170
    %s172 = ssub.s32 %s22, %s29
    %p173 = scmp.eq.s32.totalorder %s172, 0
    %s175 = sadd.s32 %s174, 1
    %s176 = scalar_select %p173, %s174, %s175
    %p179 = pneg %p173
    %p180 = scmp.eq.s32.totalorder %s14, 3
    %p181 = por %p179, %p180
    %p182 = scmp.ne.s32.totalorder %s174, %s177
    %p183 = scmp.eq.s32.totalorder %s14, 0
    %p184 = por %p182, %p183
    %p185 = scmp.ne.s32.totalorder %s174, %s177
    %p186 = scmp.eq.s32.totalorder %s19, 3
    %p187 = por %p185, %p186
    %p188 = scmp.ne.s32.totalorder %s177, %s178
    %p189 = scmp.eq.s32.totalorder %s19, 0
    %p190 = por %p188, %p189
    %p191 = scmp.ne.s32.totalorder %s177, %s178
    %p192 = scmp.eq.s32.totalorder %s20, 3
    %p193 = por %p191, %p192
    %p195 = scmp.ne.s32.totalorder %s178, %s194
    %p196 = scmp.eq.s32.totalorder %s20, 0
    %p197 = por %p195, %p196
    %s199 = sadd.s32 %s198, 1
    %p202 = scmp.eq.s32.totalorder %s14, 3
    %p203 = scmp.ne.s32.totalorder %s198, %s200
    %p204 = scmp.eq.s32.totalorder %s14, 0
    %p205 = por %p203, %p204
    %p206 = scmp.ne.s32.totalorder %s198, %s200
    %p207 = scmp.eq.s32.totalorder %s19, 3
    %p208 = por %p206, %p207
    %p209 = scmp.ne.s32.totalorder %s200, %s201
    %p210 = scmp.eq.s32.totalorder %s19, 0
    %p211 = por %p209, %p210
    %p212 = scmp.ne.s32.totalorder %s200, %s201
    %p213 = scmp.eq.s32.totalorder %s20, 3
    %p214 = por %p212, %p213
    %p216 = scmp.ne.s32.totalorder %s201, %s215
    %p217 = scmp.eq.s32.totalorder %s20, 0
    %p218 = por %p216, %p217
    %s220 = sadd.s32 %s219, 1
    %p223 = scmp.eq.s32.totalorder %s14, 3
    %p224 = scmp.ne.s32.totalorder %s219, %s221
    %p225 = scmp.eq.s32.totalorder %s14, 0
    %p226 = por %p224, %p225
    %p227 = scmp.ne.s32.totalorder %s219, %s221
    %p228 = scmp.eq.s32.totalorder %s19, 3
    %p229 = por %p227, %p228
    %p230 = scmp.ne.s32.totalorder %s221, %s222
    %p231 = scmp.eq.s32.totalorder %s19, 0
    %p232 = por %p230, %p231
    %p233 = scmp.ne.s32.totalorder %s221, %s222
    %p234 = scmp.eq.s32.totalorder %s20, 3
    %p235 = por %p233, %p234
    %p237 = scmp.ne.s32.totalorder %s222, %s236
    %p238 = scmp.eq.s32.totalorder %s20, 0
    %p239 = por %p237, %p238
    %s240 = ssub.s32 %s21, %s33
    %p241 = scmp.eq.s32.totalorder %s240, 0
    %s243 = sadd.s32 %s242, 1
    %s244 = scalar_select %p241, %s242, %s243
    %p247 = pneg %p241
    %p248 = scmp.eq.s32.totalorder %s14, 3
    %p249 = por %p247, %p248
    %p250 = scmp.ne.s32.totalorder %s242, %s245
    %p251 = scmp.eq.s32.totalorder %s14, 0
    %p252 = por %p250, %p251
    %p253 = scmp.ne.s32.totalorder %s242, %s245
    %p254 = scmp.eq.s32.totalorder %s19, 3
    %p255 = por %p253, %p254
    %p256 = scmp.ne.s32.totalorder %s245, %s246
    %p257 = scmp.eq.s32.totalorder %s19, 0
    %p258 = por %p256, %p257
    %p259 = scmp.ne.s32.totalorder %s245, %s246
    %p260 = scmp.eq.s32.totalorder %s20, 3
    %p261 = por %p259, %p260
    %p263 = scmp.ne.s32.totalorder %s246, %s262
    %p264 = scmp.eq.s32.totalorder %s20, 0
    %p265 = por %p263, %p264
    %p266 = scmp.le.s32.totalorder 1, %s14
    %p267 = scmp.lt.s32.totalorder %s14, 5
    %p268 = pnand %p266, %p267
    %p269 = pneg %p268
    // Predicated region
    $region9: #{_lambda_.8} parent=5 // pred_check
      _
    $region10: #{_lambda_.8} parent=5 // pred_check_branch
      %271 = sbr.rel (%p268) target = $region12
    $region11: #{_lambda_.8} parent=5 // pred_region
      %s272 = ssub.s32 %s14, 1
      // Predicated region
      $region13: #{_lambda_.8} parent=11 // pred_check
        %p273 = pneg %p211
      $region14: #{_lambda_.8} parent=11 // pred_check_branch
        %275 = sbr.rel (%p273) target = $region16
      $region15: #{_lambda_.8} parent=11 // pred_region
        _
      $region16: #{_lambda_.8} parent=11 // pred_fallthru
        _
      // Predicated region
      $region17: #{_lambda_.8} parent=11 // pred_check
        %p276 = pneg %p232
      $region18: #{_lambda_.8} parent=11 // pred_check_branch
        %278 = sbr.rel (%p276) target = $region20
      $region19: #{_lambda_.8} parent=11 // pred_region
        _
      $region20: #{_lambda_.8} parent=11 // pred_fallthru
        _
    $region12: #{_lambda_.8} parent=5 // pred_fallthru
      _
    %p279 = scmp.lt.s32.totalorder %s14, 4
    // Predicated region
    $region21: #{_lambda_.8} parent=5 // pred_check
      %p280 = pneg %p279
    $region22: #{_lambda_.8} parent=5 // pred_check_branch
      %282 = sbr.rel (%p280) target = $region24
    $region23: #{_lambda_.8} parent=5 // pred_region
      // Predicated region
      $region25: #{_lambda_.8} parent=23 // pred_check
        %p283 = pneg %p46
      $region26: #{_lambda_.8} parent=23 // pred_check_branch
        %285 = sbr.rel (%p283) target = $region28
      $region27: #{_lambda_.8} parent=23 // pred_region
        %p286 = scmp.lt.s32.totalorder %s21, 1
        %s287 = scalar_select %p286, %s21, 1
        %s288 = smul.addr %s287, 4
        %s289 = scalar_lea.vmem %s0, %s288
      $region28: #{_lambda_.8} parent=23 // pred_fallthru
        _
      // Predicated region
      $region29: #{_lambda_.8} parent=23 // pred_check
        %p290 = pneg %p74
      $region30: #{_lambda_.8} parent=23 // pred_check_branch
        %292 = sbr.rel (%p290) target = $region32
      $region31: #{_lambda_.8} parent=23 // pred_region
        %p293 = scmp.lt.s32.totalorder %s21, 1
        %s294 = scalar_select %p293, %s21, 1
        %p295 = scmp.lt.s32.totalorder %s22, 1
        %s296 = scalar_select %p295, %s22, 1
        %s297 = smul.addr %s294, 2
        %s298 = sadd.s32 %s296, %s297
        %s299 = smul.addr %s298, 4
        %s300 = scalar_lea.vmem %s1, %s299
      $region32: #{_lambda_.8} parent=23 // pred_fallthru
        _
      // Predicated region
      $region33: #{_lambda_.8} parent=23 // pred_check
        %p301 = pneg %p102
      $region34: #{_lambda_.8} parent=23 // pred_check_branch
        %303 = sbr.rel (%p301) target = $region36
      $region35: #{_lambda_.8} parent=23 // pred_region
        %p304 = scmp.lt.s32.totalorder %s21, 1
        %s305 = scalar_select %p304, %s21, 1
        %p306 = scmp.lt.s32.totalorder %s22, 1
        %s307 = scalar_select %p306, %s22, 1
        %s308 = smul.addr %s305, 2
        %s309 = sadd.s32 %s307, %s308
        %s310 = smul.addr %s309, 4
        %s311 = scalar_lea.vmem %s2, %s310
      $region36: #{_lambda_.8} parent=23 // pred_fallthru
        _
      // Predicated region
      $region37: #{_lambda_.8} parent=23 // pred_check
        %p312 = pneg %p130
      $region38: #{_lambda_.8} parent=23 // pred_check_branch
        %314 = sbr.rel (%p312) target = $region40
      $region39: #{_lambda_.8} parent=23 // pred_region
        %p315 = scmp.lt.s32.totalorder %s21, 1
        %s316 = scalar_select %p315, %s21, 1
        %p317 = scmp.lt.s32.totalorder %s22, 1
        %s318 = scalar_select %p317, %s22, 1
        %s319 = smul.addr %s316, 2
        %s320 = sadd.s32 %s318, %s319
        %s321 = smul.addr %s320, 4
        %s322 = scalar_lea.vmem %s3, %s321
      $region40: #{_lambda_.8} parent=23 // pred_fallthru
        _
      // Predicated region
      $region41: #{_lambda_.8} parent=23 // pred_check
        %p323 = pneg %p158
      $region42: #{_lambda_.8} parent=23 // pred_check_branch
        %325 = sbr.rel (%p323) target = $region44
      $region43: #{_lambda_.8} parent=23 // pred_region
        %p326 = scmp.lt.s32.totalorder %s21, 1
        %s327 = scalar_select %p326, %s21, 1
        %p328 = scmp.lt.s32.totalorder %s22, 1
        %s329 = scalar_select %p328, %s22, 1
        %s330 = smul.addr %s327, 2
        %s331 = sadd.s32 %s329, %s330
        %s332 = smul.addr %s331, 4
        %s333 = scalar_lea.vmem %s4, %s332
      $region44: #{_lambda_.8} parent=23 // pred_fallthru
        _
      // Predicated region
      $region45: #{_lambda_.8} parent=23 // pred_check
        %p334 = pneg %p184
      $region46: #{_lambda_.8} parent=23 // pred_check_branch
        %336 = sbr.rel (%p334) target = $region48
      $region47: #{_lambda_.8} parent=23 // pred_region
        %p337 = scmp.lt.s32.totalorder %s22, 1
        %s338 = scalar_select %p337, %s22, 1
        %s339 = smul.addr %s338, 2
        %s340 = smul.addr %s339, 4
        %s341 = scalar_lea.vmem %s5, %s340
      $region48: #{_lambda_.8} parent=23 // pred_fallthru
        _
    $region24: #{_lambda_.8} parent=5 // pred_fallthru
      _
    %p342 = scmp.le.s32.totalorder 1, %s14
    %p343 = scmp.lt.s32.totalorder %s14, 5
    %p344 = pnand %p342, %p343
    %p345 = pneg %p344
    // Predicated region
    $region49: #{_lambda_.8} parent=5 // pred_check
      _
    $region50: #{_lambda_.8} parent=5 // pred_check_branch
      %347 = sbr.rel (%p344) target = $region52
    $region51: #{_lambda_.8} parent=5 // pred_region
      %s348 = ssub.s32 %s14, 1
      %p349 = scmp.lt.s32.totalorder %s23, 1
      %s350 = scalar_select %p349, %s23, 1
      %s351 = smul.addr %s350, 4
      %s352 = scalar_lea.vmem %s0, %s351
      %p353 = pneg %p52
      %p354 = pneg %p49
      %p355 = scmp.lt.s32.totalorder %s23, 1
      %s356 = scalar_select %p355, %s23, 1
      %p357 = scmp.lt.s32.totalorder %s24, 1
      %s358 = scalar_select %p357, %s24, 1
      %s359 = smul.addr %s356, 2
      %s360 = sadd.s32 %s358, %s359
      %s361 = smul.addr %s360, 4
      %s362 = scalar_lea.vmem %s1, %s361
      %p363 = pneg %p80
      %p364 = pneg %p77
      %p365 = scmp.lt.s32.totalorder %s23, 1
      %s366 = scalar_select %p365, %s23, 1
      %p367 = scmp.lt.s32.totalorder %s24, 1
      %s368 = scalar_select %p367, %s24, 1
      %s369 = smul.addr %s366, 2
      %s370 = sadd.s32 %s368, %s369
      %s371 = smul.addr %s370, 4
      %s372 = scalar_lea.vmem %s2, %s371
      %p373 = pneg %p108
      %p374 = pneg %p105
      %p375 = scmp.lt.s32.totalorder %s23, 1
      %s376 = scalar_select %p375, %s23, 1
      %p377 = scmp.lt.s32.totalorder %s24, 1
      %s378 = scalar_select %p377, %s24, 1
      %s379 = smul.addr %s376, 2
      %s380 = sadd.s32 %s378, %s379
      %s381 = smul.addr %s380, 4
      %s382 = scalar_lea.vmem %s3, %s381
      %p383 = pneg %p136
      %p384 = pneg %p133
      %p385 = scmp.lt.s32.totalorder %s23, 1
      %s386 = scalar_select %p385, %s23, 1
      %p387 = scmp.lt.s32.totalorder %s24, 1
      %s388 = scalar_select %p387, %s24, 1
      %s389 = smul.addr %s386, 2
      %s390 = sadd.s32 %s388, %s389
      %s391 = smul.addr %s390, 4
      %s392 = scalar_lea.vmem %s4, %s391
      %p393 = pneg %p164
      %p394 = pneg %p161
      %p395 = scmp.lt.s32.totalorder %s24, 1
      %s396 = scalar_select %p395, %s24, 1
      %s397 = smul.addr %s396, 2
      %s398 = smul.addr %s397, 4
      %s399 = scalar_lea.vmem %s5, %s398
      %p400 = pneg %p190
      %p401 = pneg %p187
      %p402 = pneg %p211
      %p403 = pneg %p208
      %p404 = pneg %p232
      %p405 = pneg %p229
      %p406 = pneg %p258
      %p407 = pneg %p255
      %p408 = scmp.lt.s32.totalorder %s23, 1
      %s409 = scalar_select %p408, %s23, 1
      %s410 = smul.addr %s409, 4
      %s411 = scalar_lea.vmem %s8, %s410
      %p412 = scmp.lt.s32.totalorder %s23, 1
      %s413 = scalar_select %p412, %s23, 1
      %s414 = smul.addr %s413, 4
      %s415 = scalar_lea.vmem %s0, %s414
      %p416 = scmp.lt.s32.totalorder %s23, 1
      %s417 = scalar_select %p416, %s23, 1
      %p418 = scmp.lt.s32.totalorder %s24, 1
      %s419 = scalar_select %p418, %s24, 1
      %s420 = smul.addr %s417, 2
      %s421 = sadd.s32 %s419, %s420
      %s422 = smul.addr %s421, 4
      %s423 = scalar_lea.vmem %s1, %s422
      %p424 = scmp.lt.s32.totalorder %s23, 1
      %s425 = scalar_select %p424, %s23, 1
      %p426 = scmp.lt.s32.totalorder %s24, 1
      %s427 = scalar_select %p426, %s24, 1
      %s428 = smul.addr %s425, 2
      %s429 = sadd.s32 %s427, %s428
      %s430 = smul.addr %s429, 4
      %s431 = scalar_lea.vmem %s2, %s430
      %p432 = scmp.lt.s32.totalorder %s23, 1
      %s433 = scalar_select %p432, %s23, 1
      %p434 = scmp.lt.s32.totalorder %s24, 1
      %s435 = scalar_select %p434, %s24, 1
      %s436 = smul.addr %s433, 2
      %s437 = sadd.s32 %s435, %s436
      %s438 = smul.addr %s437, 4
      %s439 = scalar_lea.vmem %s3, %s438
      %p440 = scmp.lt.s32.totalorder %s23, 1
      %s441 = scalar_select %p440, %s23, 1
      %p442 = scmp.lt.s32.totalorder %s24, 1
      %s443 = scalar_select %p442, %s24, 1
      %s444 = smul.addr %s441, 2
      %s445 = sadd.s32 %s443, %s444
      %s446 = smul.addr %s445, 4
      %s447 = scalar_lea.vmem %s4, %s446
      %p448 = scmp.lt.s32.totalorder %s24, 1
      %s449 = scalar_select %p448, %s24, 1
      %s450 = smul.addr %s449, 2
      %s451 = smul.addr %s450, 4
      %s452 = scalar_lea.vmem %s5, %s451
      %p453 = scmp.lt.s32.totalorder %s23, 1
      %s454 = scalar_select %p453, %s23, 1
      %s455 = smul.addr %s454, 4
      %s456 = scalar_lea.vmem %s8, %s455
      %p458 = scmp.eq.s32.totalorder %s24, 0
      // Predicated region
      $region53: #{_lambda_.8} parent=51 // pred_check
        %p459 = pneg %p458
      $region54: #{_lambda_.8} parent=51 // pred_check_branch
        %461 = sbr.rel (%p459) target = $region56
      $region55: #{_lambda_.8} parent=51 // pred_region
        %v462 = vld [vmem:[%s415] sm:$0xf]
        %v463 = vunpack.c.l.bf16 %v462
        %vm464 = vcmask 261120
        %465 = vst.msk [vmem:[#allocation2] sm:$0xff] %vm464, %v463
      $region56: #{_lambda_.8} parent=51 // pred_fallthru
        _
      %v466 = vld [vmem:[%s6] sm:$0xff]
      %v467 = vld [vmem:[%s7] sm:$0xff]
      %v468 = vld [vmem:[%s423] sm:$0xf]
      %v469 = vunpack.c.l.bf16 %v468
      %v470 = vld [vmem:[%s431] sm:$0xf]
      %v471 = vunpack.c.l.bf16 %v470
      %v472 = vmul.f32 %v469, %v467
      %474 = vrot.lane.b32.xlu0 %v466, 8
      %v475 = vpop.permute.xlu0 %474
      %v477 = vmul.f32 %v469, %v475
      %479 = vrot.lane.b32.xlu0 %v477, 120
      %v480 = vpop.permute.xlu0 %479
      %v482 = vsub.f32 %v472, %v480
      %484 = vrot.lane.b32.xlu0 %v467, 8
      %v485 = vpop.permute.xlu0 %484
      %v487 = vmul.f32 %v469, %v485
      %v488 = vmul.f32 %v469, %v466
      %490 = vrot.lane.b32.xlu0 %v488, 8
      %v491 = vpop.permute.xlu0 %490
      %v493 = vadd.f32 %v487, %v491
      %vm494 = vcmask 64512
      %v495 = vsel %vm494, %v482, %v493
      %v496 = vmul.f32 %v471, %v467
      %v497 = vmul.f32 %v471, %v475
      %499 = vrot.lane.b32.xlu0 %v497, 120
      %v500 = vpop.permute.xlu0 %499
      %v502 = vsub.f32 %v496, %v500
      %v503 = vmul.f32 %v471, %v485
      %v504 = vmul.f32 %v471, %v466
      %506 = vrot.lane.b32.xlu0 %v504, 8
      %v507 = vpop.permute.xlu0 %506
      %v509 = vadd.f32 %v503, %v507
      %v510 = vsel %vm494, %v502, %v509
      %v511 = vpack.c.bf16 %v495, %v495
      %v512 = vpack.c.bf16 %v510, %v510
      %vm513 = vcmask 130048
      %v515 = vsel %vm513, %v511, 0
      %v518 = vsel %vm513, %v512, 0
      %520 = vmatprep.subr.bf16.mxu0 0
      %521 = vmatpush1.bf16.xpose.msra.mxu0 %v518
      %522 = vmatprep.subr.bf16.mxu0 0
      %523 = vmatpush1.bf16.xpose.msra.mxu0 0
      %524 = vmatprep.subr.bf16.mxu0 0
      %525 = vmatpush1.bf16.xpose.msra.mxu0 0
      %526 = vmatprep.subr.bf16.mxu0 0
      %527 = vmatpush1.bf16.xpose.msra.mxu0 0
      %528 = vmatprep.subr.bf16.mxu0 0
      %529 = vmatpush1.bf16.xpose.msra.mxu0 0
      %530 = vmatprep.subr.bf16.mxu0 0
      %531 = vmatpush1.bf16.xpose.msra.mxu0 0
      %532 = vmatprep.subr.bf16.mxu0 0
      %533 = vmatpush1.bf16.xpose.msra.mxu0 0
      %534 = vmatprep.subr.bf16.mxu0 0
      %535 = vmatpush1.bf16.xpose.msra.mxu0 0
      %536 = vmatprep.subr.bf16.mxu0 0
      %537 = vmatpush1.bf16.xpose.msra.mxu0 0
      %538 = vmatprep.subr.bf16.mxu0 0
      %539 = vmatpush1.bf16.xpose.msra.mxu0 0
      %540 = vmatprep.subr.bf16.mxu0 0
      %541 = vmatpush1.bf16.xpose.msra.mxu0 0
      %542 = vmatprep.subr.bf16.mxu0 0
      %543 = vmatpush1.bf16.xpose.msra.mxu0 0
      %544 = vmatprep.subr.bf16.mxu0 0
      %545 = vmatpush1.bf16.xpose.msra.mxu0 0
      %546 = vmatprep.subr.bf16.mxu0 0
      %547 = vmatpush1.bf16.xpose.msra.mxu0 0
      %548 = vmatprep.subr.bf16.mxu0 0
      %549 = vmatpush1.bf16.xpose.msra.mxu0 0
      %550 = vmatprep.subr.bf16.mxu0 0
      %551 = vmatpush1.bf16.xpose.msra.mxu0 0
      %552 = vmatprep.mubr.bf16.mxu0 0
      %553 = vmatmul.mubr.bf16.gmra.mrb[0].mxu0 %v515
      %v554 = vpop.f32.mrb[0].mxu0
      %v555 = vadd.f32 0.0, %v554
      %v556 = vpop.f32.mrb[0].mxu0
      %v557 = vpop.f32.mrb[0].mxu0
      %v558 = vpop.f32.mrb[0].mxu0
      %559 = vdwg.mxu0
      %s560 = scvt.s32.f32 %s24
      %v561 = vstv %s560
      %v562 = vsub.f32 -5.0, %v561
      %v563 = vmul.f32 %v562, 0.6931472
      %v564 = vmul.f32 %v563, 1.442695
      %v565 = vpow.pop %v564
      %v566 = vsub.f32 1.0, %v565
      %v567 = vlog2.pop %v566
      %v568 = vmul.f32 %v567, 0.6931472
      %v569 = vlaneseq
      %v570 = vshrl.u32 %v569, 7
      %v571 = vcvt.s32.f32 %v570
      %v572 = vlaneseq
      %v573 = vand.u32 %v572, 127
      %v574 = vcvt.s32.f32 %v573
      %v575 = vsub.f32 %v571, 3.5
      %v576 = vmul.f32 %v575, %v568
      %v577 = vmul.f32 %v576, 1.442695
      %v578 = vpow.pop %v577
      %v579 = vsub.f32 3.5, %v574
      %v580 = vmul.f32 %v579, %v568
      %v581 = vmul.f32 %v580, 1.442695
      %v582 = vpow.pop %v581
      %vm583 = vcmp.ge.s32.totalorder %v570, %v573
      %v584 = vmul.f32 %v578, %v582
      %v585 = vsel %vm583, %v584, 0.0
      %v586 = vmul.f32 %v555, %v585
      %v587 = vmul.f32 %v568, 1.442695
      %v588 = vpow.pop %v587
      %v589 = vadd.f32 %v571, 1.0
      %v590 = vmul.f32 %v589, %v568
      %v591 = vmul.f32 %v590, 1.442695
      %v592 = vpow.pop %v591
      %v593 = vsub.f32 1.0, %v592
      %v594 = vsub.f32 1.0, %v588
      %v595 = vrcp.pop %v594
      %v596 = vmul.f32 %v593, %v595
      %v597 = vand.u32 2147483647, %v586
      %v598 = vsel %vm494, %v597, 0.0
      %599 = vadd.xlane.f32.xlu0 %v598
      %v600 = vpop.xlane.xlu0 %599
      %v601 = vrsqrt.pop %v596
      %v602 = vmul.f32 %v596, %v601
      %vm603 = vcmp.eq.f32.partialorder %v596, inf
      %v604 = vsel %vm603, %v596, %v602
      %vm605 = vcmp.eq.f32.partialorder %v596, 0.0
      %v606 = vand.u32 %v596, 2147483648
      %v607 = vsel %vm605, %v606, %v604
      %v608 = vmax.f32 %v600, %v607
      %v609 = vrcp.pop %v608
      %v610 = vmul.f32 %v586, %v609
      %v611 = vpack.c.bf16 %v610, %v610
      %v612 = vld [vmem:[%s439] sm:$0xf]
      %v614 = vsel %vm494, %v611, 0
      %vm616 = vcmask 1043456
      %v618 = vsel %vm616, %v612, 0
      %620 = vmatprep.subr.bf16.mxu0 0
      %621 = vmatpush1.bf16.msra.mxu0 %v618
      %622 = vmatprep.subr.bf16.mxu0 0
      %623 = vmatpush1.bf16.msra.mxu0 0
      %624 = vmatprep.subr.bf16.mxu0 0
      %625 = vmatpush1.bf16.msra.mxu0 0
      %626 = vmatprep.subr.bf16.mxu0 0
      %627 = vmatpush1.bf16.msra.mxu0 0
      %628 = vmatprep.subr.bf16.mxu0 0
      %629 = vmatpush1.bf16.msra.mxu0 0
      %630 = vmatprep.subr.bf16.mxu0 0
      %631 = vmatpush1.bf16.msra.mxu0 0
      %632 = vmatprep.subr.bf16.mxu0 0
      %633 = vmatpush1.bf16.msra.mxu0 0
      %634 = vmatprep.subr.bf16.mxu0 0
      %635 = vmatpush1.bf16.msra.mxu0 0
      %636 = vmatprep.subr.bf16.mxu0 0
      %637 = vmatpush1.bf16.msra.mxu0 0
      %638 = vmatprep.subr.bf16.mxu0 0
      %639 = vmatpush1.bf16.msra.mxu0 0
      %640 = vmatprep.subr.bf16.mxu0 0
      %641 = vmatpush1.bf16.msra.mxu0 0
      %642 = vmatprep.subr.bf16.mxu0 0
      %643 = vmatpush1.bf16.msra.mxu0 0
      %644 = vmatprep.subr.bf16.mxu0 0
      %645 = vmatpush1.bf16.msra.mxu0 0
      %646 = vmatprep.subr.bf16.mxu0 0
      %647 = vmatpush1.bf16.msra.mxu0 0
      %648 = vmatprep.subr.bf16.mxu0 0
      %649 = vmatpush1.bf16.msra.mxu0 0
      %650 = vmatprep.subr.bf16.mxu0 0
      %651 = vmatpush1.bf16.msra.mxu0 0
      %652 = vmatprep.mubr.bf16.mxu0 0
      %653 = vmatmul.mubr.bf16.gmra.mrb[0].mxu0 %v614
      %v654 = vpop.f32.mrb[0].mxu0
      %v655 = vadd.f32 0.0, %v654
      %v656 = vpop.f32.mrb[0].mxu0
      %v657 = vpop.f32.mrb[0].mxu0
      %v658 = vpop.f32.mrb[0].mxu0
      %659 = vdwg.mxu0
      %v660 = vmul.f32 %v655, %v655
      %v661 = vsel %vm513, %v660, 0.0
      %662 = vadd.xlane.f32.xlu0 %v661
      %v663 = vpop.xlane.xlu0 %662
      %v664 = vrcp.pop 16.0
      %v665 = vmul.f32 %v663, %v664
      %v666 = vadd.f32 %v665, 1e-05
      %v667 = vrsqrt.pop %v666
      %v668 = vmul.f32 %v655, %v667
      %v669 = vld [vmem:[%s447] sm:$0xf]
      %v670 = vunpack.c.l.bf16 %v669
      %v671 = vsub.f32 0.0, %v670
      %v672 = vmul.f32 %v671, 1.442695
      %v673 = vpow.pop %v672
      %v674 = vadd.f32 %v673, 1.0
      %v675 = vrcp.pop %v674
      %v676 = vmul.f32 %v670, %v675
      %v677 = vmul.f32 %v668, %v676
      %v678 = vld [vmem:[#allocation2] sm:$0xff]
      %v679 = vpack.c.bf16 %v677, %v677
      %v680 = vld [vmem:[%s452] sm:$0xf]
      %v681 = vld [vmem:[%s452 + $0x4] sm:$0xf]
      %v684 = vunpack.c.l.b16 %v680
      %v685 = vunpack.c.l.b16 %v681
      %v686 = vpack.c.b16 %v685, %v684
      %v689 = vsel %vm513, %v679, 0
      %691 = vmatprep.subr.bf16.mxu0 0
      %692 = vmatpush1.bf16.msra.mxu0 %v686
      %693 = vmatprep.subr.bf16.mxu0 0
      %694 = vmatpush1.bf16.msra.mxu0 0
      %695 = vmatprep.subr.bf16.mxu0 0
      %696 = vmatpush1.bf16.msra.mxu0 0
      %697 = vmatprep.subr.bf16.mxu0 0
      %698 = vmatpush1.bf16.msra.mxu0 0
      %699 = vmatprep.subr.bf16.mxu0 0
      %700 = vmatpush1.bf16.msra.mxu0 0
      %701 = vmatprep.subr.bf16.mxu0 0
      %702 = vmatpush1.bf16.msra.mxu0 0
      %703 = vmatprep.subr.bf16.mxu0 0
      %704 = vmatpush1.bf16.msra.mxu0 0
      %705 = vmatprep.subr.bf16.mxu0 0
      %706 = vmatpush1.bf16.msra.mxu0 0
      %707 = vmatprep.subr.bf16.mxu0 0
      %708 = vmatpush1.bf16.msra.mxu0 0
      %709 = vmatprep.subr.bf16.mxu0 0
      %710 = vmatpush1.bf16.msra.mxu0 0
      %711 = vmatprep.subr.bf16.mxu0 0
      %712 = vmatpush1.bf16.msra.mxu0 0
      %713 = vmatprep.subr.bf16.mxu0 0
      %714 = vmatpush1.bf16.msra.mxu0 0
      %715 = vmatprep.subr.bf16.mxu0 0
      %716 = vmatpush1.bf16.msra.mxu0 0
      %717 = vmatprep.subr.bf16.mxu0 0
      %718 = vmatpush1.bf16.msra.mxu0 0
      %719 = vmatprep.subr.bf16.mxu0 0
      %720 = vmatpush1.bf16.msra.mxu0 0
      %721 = vmatprep.subr.bf16.mxu0 0
      %722 = vmatpush1.bf16.msra.mxu0 0
      %723 = vmatprep.mubr.bf16.mxu0 0
      %724 = vmatmul.mubr.bf16.gmra.mrb[0].mxu0 %v689
      %v725 = vpop.f32.mrb[0].mxu0
      %v726 = vadd.f32 0.0, %v725
      %v727 = vpop.f32.mrb[0].mxu0
      %v728 = vpop.f32.mrb[0].mxu0
      %v729 = vpop.f32.mrb[0].mxu0
      %730 = vdwg.mxu0
      %v731 = vadd.f32 %v678, %v726
      %vm732 = vcmask 261120
      %733 = vst.msk [vmem:[#allocation2] sm:$0xff] %vm732, %v731
      %p734 = scmp.eq.s32.totalorder %s24, 1
      // Predicated region
      $region57: #{_lambda_.8} parent=51 // pred_check
        %p735 = pneg %p734
      $region58: #{_lambda_.8} parent=51 // pred_check_branch
        %737 = sbr.rel (%p735) target = $region60
      $region59: #{_lambda_.8} parent=51 // pred_region
        %v738 = vld [vmem:[#allocation2] sm:$0xff]
        %v739 = vpack.c.bf16 %v738, %v738
        %vm740 = vcmask 257024
        %741 = vst.msk [vmem:[%s456] sm:$0xf] %vm740, %v739
      $region60: #{_lambda_.8} parent=51 // pred_fallthru
        _
      %p742 = scmp.lt.s32.totalorder %s23, 1
      %s743 = scalar_select %p742, %s23, 1
      %s744 = smul.addr %s743, 4
      %s745 = scalar_lea.vmem %s8, %s744
      // Predicated region
      $region61: #{_lambda_.8} parent=51 // pred_check
        %p746 = pneg %p255
      $region62: #{_lambda_.8} parent=51 // pred_check_branch
        %748 = sbr.rel (%p746) target = $region64
      $region63: #{_lambda_.8} parent=51 // pred_region
        _
      $region64: #{_lambda_.8} parent=51 // pred_fallthru
        _
    $region52: #{_lambda_.8} parent=5 // pred_fallthru
      _
    %p749 = scmp.le.s32.totalorder 2, %s14
    // Predicated region
    $region65: #{_lambda_.8} parent=5 // pred_check
      %p750 = pneg %p749
    $region66: #{_lambda_.8} parent=5 // pred_check_branch
      %752 = sbr.rel (%p750) target = $region68
    $region67: #{_lambda_.8} parent=5 // pred_region
      %s753 = ssub.s32 %s14, 2
      // Predicated region
      $region69: #{_lambda_.8} parent=67 // pred_check
        %p754 = pneg %p261
      $region70: #{_lambda_.8} parent=67 // pred_check_branch
        %756 = sbr.rel (%p754) target = $region72
      $region71: #{_lambda_.8} parent=67 // pred_region
        %p757 = scmp.lt.s32.totalorder %s25, 1
        %s758 = scalar_select %p757, %s25, 1
        %s759 = smul.addr %s758, 4
        %s760 = scalar_lea.vmem %s8, %s759
      $region72: #{_lambda_.8} parent=67 // pred_fallthru
        _
    $region68: #{_lambda_.8} parent=5 // pred_fallthru
      _
  $region6: #{_lambda_.8} parent=0 // loop_footer
    %s18 = sadd.s32 1, %s14
  $region7: #{_lambda_.8} parent=0 // loop_footer_branch
    %13 = sbr.rel target = $region3
  $region8: #{_lambda_.8} parent=0 // loop_exit
    _

// kernel: _lambda_.9
$region0: #{_lambda_.9}
  #allocation0 [shape = 'u32[]', space=smem, size = 0x4, offset = 0x4, fixed_abs, tag = 'smem constant byte address 0x4 - core index']
  #allocation1 [shape = 'u32[144,128]{1,0:T(1,128)}', space=vmem, size = 0x12000, scoped, tag = 'internal scratch']
  #allocation2 [shape = 'f32[16,32]{1,0:T(8,128)}', space=vmem, size = 0x2000, scoped, tag = 'scratch operand']
  #allocation3 [shape = 'bf16[16,32]{1,0:T(16,128)(2,1)}', space=vmem, size = 0x1000, scoped, tag = 'scratch operand']
  %s0 = inlined_call_operand.vmem [shape: bf16[16,32], index: 0, kind: input, shape index: {}]
  %s1 = inlined_call_operand.vmem [shape: f32[1,32], index: 1, kind: input, shape index: {}]
  %s2 = inlined_call_operand.vmem [shape: f32[1,32], index: 2, kind: input, shape index: {}]
  %s3 = inlined_call_operand.vmem [shape: bf16[32,64], index: 3, kind: input, shape index: {}]
  %s4 = inlined_call_operand.vmem [shape: f32[1,64], index: 4, kind: input, shape index: {}]
  %s5 = inlined_call_operand.vmem [shape: bf16[64,32], index: 5, kind: input, shape index: {}]
  %s6 = inlined_call_operand.vmem [shape: f32[1,32], index: 6, kind: input, shape index: {}]
  %s7 = inlined_call_operand.vmem [shape: bf16[16,32], index: 7, kind: output, shape index: {}]
  %s8 = sld [smem:[#allocation0]]
  $region46: #{_lambda_.9} parent=0
    _
  %s10 = ssub.s32 1, %s8
  %s11 = scalar_select 0, %s10, %s8
  // Predicated region
  $region2: #{_lambda_.9} parent=0 // pred_check
    _
  $region3: #{_lambda_.9} parent=0 // pred_check_branch
    %13 = sbr.rel (0) target = $region5
  $region4: #{_lambda_.9} parent=0 // pred_region
    _
  $region5: #{_lambda_.9} parent=0 // pred_fallthru
    _
  // Predicated region
  $region6: #{_lambda_.9} parent=0 // pred_check
    _
  $region7: #{_lambda_.9} parent=0 // pred_check_branch
    %15 = sbr.rel (0) target = $region9
  $region8: #{_lambda_.9} parent=0 // pred_region
    _
  $region9: #{_lambda_.9} parent=0 // pred_fallthru
    _
  // Predicated region
  $region10: #{_lambda_.9} parent=0 // pred_check
    _
  $region11: #{_lambda_.9} parent=0 // pred_check_branch
    %17 = sbr.rel (0) target = $region13
  $region12: #{_lambda_.9} parent=0 // pred_region
    _
  $region13: #{_lambda_.9} parent=0 // pred_fallthru
    _
  // Predicated region
  $region14: #{_lambda_.9} parent=0 // pred_check
    _
  $region15: #{_lambda_.9} parent=0 // pred_check_branch
    %19 = sbr.rel (0) target = $region17
  $region16: #{_lambda_.9} parent=0 // pred_region
    _
  $region17: #{_lambda_.9} parent=0 // pred_fallthru
    _
  // Predicated region
  $region18: #{_lambda_.9} parent=0 // pred_check
    _
  $region19: #{_lambda_.9} parent=0 // pred_check_branch
    %21 = sbr.rel (0) target = $region21
  $region20: #{_lambda_.9} parent=0 // pred_region
    _
  $region21: #{_lambda_.9} parent=0 // pred_fallthru
    _
  // Predicated region
  $region22: #{_lambda_.9} parent=0 // pred_check
    _
  $region23: #{_lambda_.9} parent=0 // pred_check_branch
    %23 = sbr.rel (0) target = $region25
  $region24: #{_lambda_.9} parent=0 // pred_region
    _
  $region25: #{_lambda_.9} parent=0 // pred_fallthru
    _
  // Predicated region
  $region26: #{_lambda_.9} parent=0 // pred_check
    _
  $region27: #{_lambda_.9} parent=0 // pred_check_branch
    %25 = sbr.rel (0) target = $region29
  $region28: #{_lambda_.9} parent=0 // pred_region
    _
  $region29: #{_lambda_.9} parent=0 // pred_fallthru
    _
  %p27 = scmp.eq.s32.totalorder 0, 0
  // Predicated region
  $region30: #{_lambda_.9} parent=0 // pred_check
    %p28 = pneg %p27
  $region31: #{_lambda_.9} parent=0 // pred_check_branch
    %30 = sbr.rel (%p28) target = $region33
  $region32: #{_lambda_.9} parent=0 // pred_region
    %v31 = vld [vmem:[%s0] sm:$0xf]
    %v32 = vld [vmem:[%s0 + $0x4] sm:$0xf]
    %v33 = vunpack.c.l.bf16 %v31
    %v34 = vunpack.c.l.bf16 %v32
    %vm35 = vcmask 261120
    %v36 = vsel %vm35, %v33, 0.0
    %37 = vadd.xlane.f32.xlu0 %v36
    %v38 = vpop.xlane.xlu0 %37
    %v39 = vsel %vm35, %v34, 0.0
    %40 = vadd.xlane.f32.xlu0 %v39
    %v41 = vpop.xlane.xlu0 %40
    %v42 = vrcp.pop 32.0
    %v43 = vmul.f32 %v38, %v42
    %v44 = vmul.f32 %v41, %v42
    %v45 = vsub.f32 %v33, %v43
    %v46 = vsub.f32 %v34, %v44
    %v47 = vmul.f32 %v45, %v45
    %v48 = vmul.f32 %v46, %v46
    %v49 = vsel %vm35, %v47, 0.0
    %50 = vadd.xlane.f32.xlu0 %v49
    %v51 = vpop.xlane.xlu0 %50
    %v52 = vsel %vm35, %v48, 0.0
    %53 = vadd.xlane.f32.xlu0 %v52
    %v54 = vpop.xlane.xlu0 %53
    %v55 = vmul.f32 %v51, %v42
    %v56 = vmul.f32 %v54, %v42
    %v57 = vadd.f32 %v55, 1e-05
    %v58 = vadd.f32 %v56, 1e-05
    %v59 = vrsqrt.pop %v57
    %v60 = vrsqrt.pop %v58
    %v61 = vmul.f32 %v45, %v59
    %v62 = vmul.f32 %v46, %v60
    %v63 = vld [vmem:[%s1] sm:$0x1]
    %v65 = vlaneseq
    %v66 = vshrl.u32 %v65, 7
    %v67 = vsub.s32 0, %v66
    %v68 = vrot.slane %v63, %v67
    %v70 = vmul.f32 %v61, %v68
    %v71 = vmul.f32 %v62, %v68
    %v72 = vld [vmem:[%s2] sm:$0x1]
    %v74 = vlaneseq
    %v75 = vshrl.u32 %v74, 7
    %v76 = vsub.s32 0, %v75
    %v77 = vrot.slane %v72, %v76
    %v79 = vadd.f32 %v70, %v77
    %v80 = vadd.f32 %v71, %v77
    %v81 = vpack.c.bf16 %v80, %v79
    %82 = vst.msk [vmem:[#allocation3] sm:$0xff] %vm35, %v81
    %83 = vst.msk [vmem:[#allocation2] sm:$0xff] %vm35, %v33
    %84 = vst.msk [vmem:[#allocation2 + $0x8] sm:$0xff] %vm35, %v34
  $region33: #{_lambda_.9} parent=0 // pred_fallthru
    _
  %v85 = vld [vmem:[#allocation3] sm:$0xff]
  %v86 = vld [vmem:[%s3] sm:$0xf]
  %v87 = vld [vmem:[%s3 + $0x4] sm:$0xf]
  %v88 = vld [vmem:[%s3 + $0x8] sm:$0xf]
  %v89 = vld [vmem:[%s3 + $0xc] sm:$0xf]
  %v90 = vld [vmem:[%s4] sm:$0x1]
  %v92 = vlaneseq
  %v93 = vshrl.u32 %v92, 7
  %v94 = vsub.s32 0, %v93
  %v95 = vrot.slane %v90, %v94
  %v101 = vunpack.c.l.b16 %v86
  %v102 = vunpack.c.l.b16 %v87
  %v103 = vunpack.c.l.b16 %v88
  %v104 = vunpack.c.l.b16 %v89
  %v105 = vpack.c.b16 %v102, %v101
  %v106 = vpack.c.b16 %v104, %v103
  %vm109 = vcmask 261120
  %v111 = vsel %vm109, %v85, 0
  %113 = vmatprep.subr.bf16.mxu0 0
  %114 = vmatpush1.bf16.msra.mxu0 %v105
  %115 = vmatprep.subr.bf16.mxu0 0
  %116 = vmatpush1.bf16.msra.mxu0 %v106
  %117 = vmatprep.subr.bf16.mxu0 0
  %118 = vmatpush1.bf16.msra.mxu0 0
  %119 = vmatprep.subr.bf16.mxu0 0
  %120 = vmatpush1.bf16.msra.mxu0 0
  %121 = vmatprep.subr.bf16.mxu0 0
  %122 = vmatpush1.bf16.msra.mxu0 0
  %123 = vmatprep.subr.bf16.mxu0 0
  %124 = vmatpush1.bf16.msra.mxu0 0
  %125 = vmatprep.subr.bf16.mxu0 0
  %126 = vmatpush1.bf16.msra.mxu0 0
  %127 = vmatprep.subr.bf16.mxu0 0
  %128 = vmatpush1.bf16.msra.mxu0 0
  %129 = vmatprep.subr.bf16.mxu0 0
  %130 = vmatpush1.bf16.msra.mxu0 0
  %131 = vmatprep.subr.bf16.mxu0 0
  %132 = vmatpush1.bf16.msra.mxu0 0
  %133 = vmatprep.subr.bf16.mxu0 0
  %134 = vmatpush1.bf16.msra.mxu0 0
  %135 = vmatprep.subr.bf16.mxu0 0
  %136 = vmatpush1.bf16.msra.mxu0 0
  %137 = vmatprep.subr.bf16.mxu0 0
  %138 = vmatpush1.bf16.msra.mxu0 0
  %139 = vmatprep.subr.bf16.mxu0 0
  %140 = vmatpush1.bf16.msra.mxu0 0
  %141 = vmatprep.subr.bf16.mxu0 0
  %142 = vmatpush1.bf16.msra.mxu0 0
  %143 = vmatprep.subr.bf16.mxu0 0
  %144 = vmatpush1.bf16.msra.mxu0 0
  %145 = vmatprep.mubr.bf16.mxu0 0
  %146 = vmatmul.mubr.bf16.gmra.mrb[0].mxu0 %v111
  %v147 = vpop.f32.mrb[0].mxu0
  %v148 = vadd.f32 %v95, %v147
  %v149 = vpop.f32.mrb[0].mxu0
  %v150 = vpop.f32.mrb[0].mxu0
  %v151 = vadd.f32 %v95, %v150
  %v152 = vpop.f32.mrb[0].mxu0
  %153 = vdwg.mxu0
  %v154 = vmul.f32 %v148, %v148
  %v155 = vmul.f32 %v151, %v151
  %v156 = vmul.f32 %v148, %v154
  %v157 = vmul.f32 %v151, %v155
  %v158 = vmul.f32 %v156, 0.044715
  %v159 = vmul.f32 %v157, 0.044715
  %v160 = vadd.f32 %v148, %v158
  %v161 = vadd.f32 %v151, %v159
  %v162 = vmul.f32 %v160, 0.7978846
  %v163 = vmul.f32 %v161, 0.7978846
  %v164 = vtanh.pop %v162
  %v165 = vtanh.pop %v163
  %v166 = vadd.f32 %v164, 1.0
  %v167 = vadd.f32 %v165, 1.0
  %v168 = vmul.f32 %v166, 0.5
  %v169 = vmul.f32 %v167, 0.5
  %v170 = vmul.f32 %v148, %v168
  %v171 = vmul.f32 %v151, %v169
  %v172 = vld [vmem:[#allocation2] sm:$0xff]
  %v173 = vld [vmem:[#allocation2 + $0x8] sm:$0xff]
  %v174 = vpack.c.bf16 %v171, %v170
  %v175 = vld [vmem:[%s5] sm:$0xf]
  %v176 = vld [vmem:[%s5 + $0x4] sm:$0xf]
  %v177 = vld [vmem:[%s5 + $0x8] sm:$0xf]
  %v178 = vld [vmem:[%s5 + $0xc] sm:$0xf]
  %v179 = vld [vmem:[%s5 + $0x10] sm:$0xf]
  %v180 = vld [vmem:[%s5 + $0x14] sm:$0xf]
  %v181 = vld [vmem:[%s5 + $0x18] sm:$0xf]
  %v182 = vld [vmem:[%s5 + $0x1c] sm:$0xf]
  %v191 = vunpack.c.l.b16 %v175
  %v192 = vunpack.c.l.b16 %v176
  %v193 = vunpack.c.l.b16 %v177
  %v194 = vunpack.c.l.b16 %v178
  %v195 = vunpack.c.l.b16 %v179
  %v196 = vunpack.c.l.b16 %v180
  %v197 = vunpack.c.l.b16 %v181
  %v198 = vunpack.c.l.b16 %v182
  %v199 = vpack.c.b16 %v192, %v191
  %v200 = vpack.c.b16 %v194, %v193
  %v201 = vpack.c.b16 %v196, %v195
  %v202 = vpack.c.b16 %v198, %v197
  %vm207 = vcmask 523264
  %v209 = vsel %vm207, %v174, 0
  %211 = vmatprep.subr.bf16.mxu0 0
  %212 = vmatpush1.bf16.msra.mxu0 %v199
  %213 = vmatprep.subr.bf16.mxu0 0
  %214 = vmatpush1.bf16.msra.mxu0 %v200
  %215 = vmatprep.subr.bf16.mxu0 0
  %216 = vmatpush1.bf16.msra.mxu0 %v201
  %217 = vmatprep.subr.bf16.mxu0 0
  %218 = vmatpush1.bf16.msra.mxu0 %v202
  %219 = vmatprep.subr.bf16.mxu0 0
  %220 = vmatpush1.bf16.msra.mxu0 0
  %221 = vmatprep.subr.bf16.mxu0 0
  %222 = vmatpush1.bf16.msra.mxu0 0
  %223 = vmatprep.subr.bf16.mxu0 0
  %224 = vmatpush1.bf16.msra.mxu0 0
  %225 = vmatprep.subr.bf16.mxu0 0
  %226 = vmatpush1.bf16.msra.mxu0 0
  %227 = vmatprep.subr.bf16.mxu0 0
  %228 = vmatpush1.bf16.msra.mxu0 0
  %229 = vmatprep.subr.bf16.mxu0 0
  %230 = vmatpush1.bf16.msra.mxu0 0
  %231 = vmatprep.subr.bf16.mxu0 0
  %232 = vmatpush1.bf16.msra.mxu0 0
  %233 = vmatprep.subr.bf16.mxu0 0
  %234 = vmatpush1.bf16.msra.mxu0 0
  %235 = vmatprep.subr.bf16.mxu0 0
  %236 = vmatpush1.bf16.msra.mxu0 0
  %237 = vmatprep.subr.bf16.mxu0 0
  %238 = vmatpush1.bf16.msra.mxu0 0
  %239 = vmatprep.subr.bf16.mxu0 0
  %240 = vmatpush1.bf16.msra.mxu0 0
  %241 = vmatprep.subr.bf16.mxu0 0
  %242 = vmatpush1.bf16.msra.mxu0 0
  %243 = vmatprep.mubr.bf16.mxu0 0
  %244 = vmatmul.mubr.bf16.gmra.mrb[0].mxu0 %v209
  %v245 = vpop.f32.mrb[0].mxu0
  %v246 = vadd.f32 0.0, %v245
  %v247 = vpop.f32.mrb[0].mxu0
  %v248 = vpop.f32.mrb[0].mxu0
  %v249 = vadd.f32 0.0, %v248
  %v250 = vpop.f32.mrb[0].mxu0
  %251 = vdwg.mxu0
  %v252 = vadd.f32 %v172, %v246
  %v253 = vadd.f32 %v173, %v249
  %254 = vst.msk [vmem:[#allocation2] sm:$0xff] %vm109, %v252
  %255 = vst.msk [vmem:[#allocation2 + $0x8] sm:$0xff] %vm109, %v253
  // Predicated region
  $region34: #{_lambda_.9} parent=0 // pred_check
    %p256 = pneg %p27
  $region35: #{_lambda_.9} parent=0 // pred_check_branch
    %258 = sbr.rel (%p256) target = $region37
  $region36: #{_lambda_.9} parent=0 // pred_region
    %v259 = vld [vmem:[#allocation2] sm:$0xff]
    %v260 = vld [vmem:[#allocation2 + $0x8] sm:$0xff]
    %v261 = vld [vmem:[%s6] sm:$0x1]
    %v263 = vlaneseq
    %v264 = vshrl.u32 %v263, 7
    %v265 = vsub.s32 0, %v264
    %v266 = vrot.slane %v261, %v265
    %v268 = vadd.f32 %v259, %v266
    %v269 = vadd.f32 %v260, %v266
    %v270 = vpack.c.bf16 %v269, %v268
    %v272 = vunpack.c.l.b16 %v270
    %v273 = vunpack.c.h.b16 %v270
    %v274 = vpack.c.b16 %v272, %v272
    %v275 = vpack.c.b16 %v273, %v273
    %vm278 = vcmask 257024
    %279 = vst.msk [vmem:[%s7] sm:$0xf] %vm278, %v274
    %280 = vst.msk [vmem:[%s7 + $0x4] sm:$0xf] %vm278, %v275
  $region37: #{_lambda_.9} parent=0 // pred_fallthru
    _
  // Predicated region
  $region38: #{_lambda_.9} parent=0 // pred_check
    _
  $region39: #{_lambda_.9} parent=0 // pred_check_branch
    %282 = sbr.rel (0) target = $region41
  $region40: #{_lambda_.9} parent=0 // pred_region
    _
  $region41: #{_lambda_.9} parent=0 // pred_fallthru
    _
  // Predicated region
  $region42: #{_lambda_.9} parent=0 // pred_check
    _
  $region43: #{_lambda_.9} parent=0 // pred_check_branch
    %284 = sbr.rel (0) target = $region45
  $region44: #{_lambda_.9} parent=0 // pred_region
    _
  $region45: #{_lambda_.9} parent=0 // pred_fallthru
    _

</llo_original>
